<compile_context>
chip_gen: v5e
topology: v5e:2x2
jax: 0.10.0
libtpu: 0.0.40
codegen_flags: <defaults>
</compile_context>

<pallas_src>
import functools
import numpy as np
import jax
import jax.numpy as jnp
from jax.experimental import pallas as pl
from jax.experimental.pallas import tpu as pltpu


PROB_LANES = 128   # lane-dense attention-prob output width (>= L, multiple of 128)


# ----------------------------- Pallas kernel --------------------------------
def decode_kernel(
    # streamed per-step input
    x_ref,                       # (1, BP, E)  f32 embedded token for step t
    # VMEM-resident activations
    enc_ref,                     # (L*BP, C)   f32, row l*BP+b <-> encoded_states[l, b, :]
    h0_ref,                      # (BP, H)     f32 initial hidden state
    # VMEM-resident attention params
    wua_ref, wwa_ref, batt_ref, va_ref,
    # VMEM-resident fused AttentionGRUCell params
    wg_ref, bg_ref, ucand_ref, wo_ref, bo_ref,
    # outputs
    fused_ref,                   # (1, BP, 2H+C)   per-step [h_new | t_i | attended]
    probs_ref,                   # (1, BP, 128)    per-step attention probs (lane-padded)
    hfin_ref,                    # (BP, H)         final hidden state (resident accumulator)
    # scratch
    h_sc,                        # (BP, H)    hidden state carried across grid steps
    uab_sc,                      # (L*BP, H)  u_a(enc) + biases, computed once at t == 0
    *, L, BP, H,
):
    f32 = jnp.float32
    t = pl.program_id(0)
    enc = enc_ref[...]                                   # (L*BP, C)

    @pl.when(t == 0)
    def _init():
        h_sc[...] = h0_ref[...]
        # one-time: u_a(encoded_states) + (b_ua + b_wa); resident for all steps
        uab_sc[...] = (jnp.dot(enc, wua_ref[...].astype(f32),
                               preferred_element_type=f32) + batt_ref[...])

    h_prev = h_sc[...]                                   # (BP, H)
    x = x_ref[0]                                         # (BP, E)

    # ---------------- Attention ('paper') ----------------
    wa = jnp.dot(h_prev, wwa_ref[...].astype(f32), preferred_element_type=f32)  # (BP, H)
    wa_rep = jnp.concatenate([wa] * L, axis=0)                                   # (L*BP, H)
    att = jnp.tanh(uab_sc[...] + wa_rep)                                         # (L*BP, H)

    # v_a projection: VPU multiply + lane reduction (no N=1 MXU matmul).
    # v_a bias dropped: it is constant across l and cancels in the softmax.
    scores = jnp.sum(att * va_ref[...], axis=-1, keepdims=True)                  # (L*BP, 1)

    # regroup to (BP, L) with static slices, pad lanes to 128 with -1e30 so the
    # exp of the padding is 0 (denominator unchanged) and the store is unmasked.
    logits = jnp.concatenate(
        [scores[l * BP:(l + 1) * BP, :] for l in range(L)]
        + [jnp.full((BP, PROB_LANES - L), -1e30, f32)], axis=1)                  # (BP, 128)
    m = jnp.max(logits, axis=1, keepdims=True)
    e = jnp.exp(logits - m)
    inv_denom = pl.reciprocal(jnp.sum(e, axis=1, keepdims=True), approx=True)
    probs = e * inv_denom                                                        # (BP, 128)

    # attended context: sum_l probs[b, l] * enc[l, b, :]
    attended = probs[:, 0:1] * enc[0:BP, :]
    for l in range(1, L):
        attended = attended + probs[:, l:l + 1] * enc[l * BP:(l + 1) * BP, :]    # (BP, C)

    # ---------------- AttentionGRUCell (fused gates) ----------------
    xc = jnp.concatenate([x, h_prev, attended], axis=-1)                         # (BP, E+H+C)
    pre = jnp.dot(xc, wg_ref[...].astype(f32),
                  preferred_element_type=f32) + bg_ref[...]                      # (BP, 3H)
    zr = jax.nn.sigmoid(pre[:, :2 * H])                                          # z and r together
    z = zr[:, :H]
    r = zr[:, H:]
    cand = pre[:, 2 * H:] + jnp.dot(r * h_prev, ucand_ref[...].astype(f32),
                                    preferred_element_type=f32)                  # (BP, H)
    s = (1.0 - z) * h_prev + z * jnp.tanh(cand)                                  # new hidden

    so = jnp.concatenate([s, x, attended], axis=-1)                              # (BP, H+E+C)
    t_i = jnp.maximum(jnp.dot(so, wo_ref[...].astype(f32),
                              preferred_element_type=f32) + bo_ref[...], 0.0)    # (BP, H)

    # carry hidden state; emit lane-dense per-step outputs
    h_sc[...] = s
    hfin_ref[...] = s
    fused_ref[0] = jnp.concatenate([s, t_i, attended], axis=-1)                  # (BP, 2H+C)
    probs_ref[0] = probs


# ----------------------------- param packing ---------------------------------
def pack_params(params):
    """Pre-transpose, fuse and bf16-cast weights (one-time, outside hot path)."""
    bf16 = jnp.bfloat16

    def wt(name):  # (out, in) -> (in, out)
        return params[name][0].T

    def bb(name):  # (1, out)
        return params[name][1]

    H = params['u_z'][0].shape[0]
    zeros_hh = jnp.zeros((H, H), jnp.float32)

    # z / r / candidate pre-activations from one fused operand [x | h | attended]
    w_gates = jnp.concatenate([
        jnp.concatenate([wt('w_z'), wt('w_r'), wt('w')], axis=1),    # (E, 3H)
        jnp.concatenate([wt('u_z'), wt('u_r'), zeros_hh], axis=1),   # (H, 3H) (cand uses r*h)
        jnp.concatenate([wt('c_z'), wt('c_r'), wt('c')], axis=1),    # (C, 3H)
    ], axis=0)
    b_gates = jnp.concatenate([
        bb('w_z') + bb('u_z') + bb('c_z'),
        bb('w_r') + bb('u_r') + bb('c_r'),
        bb('w') + bb('u') + bb('c'),
    ], axis=1)

    # output layer from fused operand [s | x | attended]
    w_out = jnp.concatenate([wt('u_o'), wt('v_o'), wt('c_o')], axis=0)
    b_out = bb('u_o') + bb('v_o') + bb('c_o')

    return dict(
        # MXU operands stored bf16 (f32 accumulation in-kernel)
        wwa_t=wt('w_a').astype(bf16),          # (H, H)
        wua_t=wt('u_a').astype(bf16),          # (C, H)
        w_gates=w_gates.astype(bf16),          # (E+H+C, 3H)
        u_cand_t=wt('u').astype(bf16),         # (H, H)
        w_out=w_out.astype(bf16),              # (H+E+C, H)
        # biases / VPU operands stay f32
        b_att=bb('w_a') + bb('u_a'),           # (1, H)
        va_row=params['v_a'][0],               # (1, H)   (v_a bias dropped: softmax-invariant)
        b_gates=b_gates,                       # (1, 3H)
        b_out=b_out,                           # (1, H)
    )


# ----------------------------- wrapper ---------------------------------------
def decode_forward(word_ids_seq, encoded_states, last_hid_state, params, packed=None):
    """Run T decode steps. Returns per-step (h, t_i, attended, probs) and final h."""
    if packed is None:
        packed = pack_params(params)

    T, B = word_ids_seq.shape
    L, _, C = encoded_states.shape
    H = last_hid_state.shape[1]
    E = params['emb'].shape[1]
    assert L <= PROB_LANES

    BP = ((B + 7) // 8) * 8        # pad batch to a multiple of 8 sublanes
    pad_b = BP - B

    # Embedding lookup (gather) is glue, done in plain JAX.
    x_seq = jnp.take(params['emb'], word_ids_seq.reshape(-1), axis=0).reshape(T, B, E)
    x_seq = jnp.pad(x_seq, ((0, 0), (0, pad_b), (0, 0)))                     # (T, BP, E)
    h0 = jnp.pad(last_hid_state, ((0, pad_b), (0, 0)))                       # (BP, H)
    enc2 = jnp.pad(encoded_states, ((0, 0), (0, pad_b), (0, 0))).reshape(L * BP, C)

    args = [
        x_seq, enc2, h0,
        packed['wua_t'], packed['wwa_t'], packed['b_att'], packed['va_row'],
        packed['w_gates'], packed['b_gates'], packed['u_cand_t'],
        packed['w_out'], packed['b_out'],
    ]

    def resident(a):   # same block every step -> DMA'd once, stays in VMEM
        return pl.BlockSpec(a.shape, lambda t: (0, 0))

    in_specs = ([pl.BlockSpec((1, BP, E), lambda t: (t, 0, 0))]     # streamed x_t
                + [resident(a) for a in args[1:]])

    out_shape = (
        jax.ShapeDtypeStruct((T, BP, 2 * H + C), jnp.float32),      # [h | t_i | attended]
        jax.ShapeDtypeStruct((T, BP, PROB_LANES), jnp.float32),     # lane-dense probs
        jax.ShapeDtypeStruct((BP, H), jnp.float32),                 # final hidden state
    )
    out_specs = (
        pl.BlockSpec((1, BP, 2 * H + C), lambda t: (t, 0, 0)),
        pl.BlockSpec((1, BP, PROB_LANES), lambda t: (t, 0, 0)),
        pl.BlockSpec((BP, H), lambda t: (0, 0)),
    )

    kernel = functools.partial(decode_kernel, L=L, BP=BP, H=H)
    fused, probs_pad, h_fin = pl.pallas_call(
        kernel,
        out_shape=out_shape,
        grid_spec=pltpu.PrefetchScalarGridSpec(
            num_scalar_prefetch=0,
            grid=(T,),
            in_specs=in_specs,
            out_specs=out_specs,
            scratch_shapes=[pltpu.VMEM((BP, H), jnp.float32),        # carried hidden state
                            pltpu.VMEM((L * BP, H), jnp.float32)],   # u_a(enc)+bias cache
        ),
        compiler_params=pltpu.CompilerParams(
            dimension_semantics=("arbitrary",),        # recurrence over timesteps
            vmem_limit_bytes=32 * 1024 * 1024),        # explicit budget (v7x: 64 MiB/TC)
    )(*args)

    h_seq = fused[:, :B, :H]                 # (T, B, H)
    comb_seq = fused[:, :B, H:2 * H]         # (T, B, H)
    attended_seq = fused[:, :B, 2 * H:]      # (T, B, C)
    probs_seq = jnp.transpose(probs_pad[:, :B, :L], (0, 2, 1))[..., None]   # (T, L, B, 1)
    return h_seq, comb_seq, attended_seq, probs_seq, h_fin[:B]


# ----------------------------- reference (pure JAX) ---------------------------
def decoder_reference(in_word_ids, enc, h_prev, params):
    def lin(v, p):
        W, b = p
        return v @ W.T + b

    x = jnp.take(params['emb'], in_word_ids, axis=0)
    ua = jnp.einsum('lbc,hc->lbh', enc, params['u_a'][0]) + params['u_a'][1]
    wa = lin(h_prev, params['w_a'])
    att = jnp.tanh(wa[None] + ua)
    logits = jnp.einsum('lbh,oh->lbo', att, params['v_a'][0]) + params['v_a'][1]
    probs = jax.nn.softmax(logits, axis=0)
    attended = jnp.sum(probs * enc, axis=0)

    z = jax.nn.sigmoid(lin(x, params['w_z']) + lin(h_prev, params['u_z'])
                       + lin(attended, params['c_z']))
    r = jax.nn.sigmoid(lin(x, params['w_r']) + lin(h_prev, params['u_r'])
                       + lin(attended, params['c_r']))
    s_tilda = jnp.tanh(lin(x, params['w']) + lin(r * h_prev, params['u'])
                       + lin(attended, params['c']))
    s = (1.0 - z) * h_prev + z * s_tilda
    t_i = jax.nn.relu(lin(s, params['u_o']) + lin(x, params['v_o'])
                      + lin(attended, params['c_o']))
    return s, t_i, attended, probs


# ----------------------------- param init -------------------------------------
def make_linear(key, out_dim, in_dim):
    kw, kb = jax.random.split(key)
    bound = 1.0 / np.sqrt(in_dim)
    W = jax.random.uniform(kw, (out_dim, in_dim), jnp.float32, -bound, bound)
    b = jax.random.uniform(kb, (1, out_dim), jnp.float32, -bound, bound)
    return W, b


def init_params(key, vocab, emb_dim, hidden, combined):
    keys = jax.random.split(key, 16)
    p = {}
    p['emb'] = jax.random.normal(keys[0], (vocab, emb_dim), jnp.float32)
    # Attention ('paper')
    p['w_a'] = make_linear(keys[1], hidden, hidden)
    p['u_a'] = make_linear(keys[2], hidden, combined)
    p['v_a'] = make_linear(keys[3], 1, hidden)
    # AttentionGRUCell
    p['w_z'] = make_linear(keys[4], hidden, emb_dim)
    p['u_z'] = make_linear(keys[5], hidden, hidden)
    p['c_z'] = make_linear(keys[6], hidden, combined)
    p['w_r'] = make_linear(keys[7], hidden, emb_dim)
    p['u_r'] = make_linear(keys[8], hidden, hidden)
    p['c_r'] = make_linear(keys[9], hidden, combined)
    p['w']   = make_linear(keys[10], hidden, emb_dim)
    p['u']   = make_linear(keys[11], hidden, hidden)
    p['c']   = make_linear(keys[12], hidden, combined)
    p['u_o'] = make_linear(keys[13], hidden, hidden)
    p['v_o'] = make_linear(keys[14], hidden, emb_dim)
    p['c_o'] = make_linear(keys[15], hidden, combined)
    return p


# ----------------------------- main -------------------------------------------
if __name__ == "__main__":
    L, B, T = 8, 8, 4          # max_sent_len, batch (>= 8 sublanes), decode steps
    VOCAB, E, H = 20, 16, 32
    C = 2 * H                  # bidirectional encoder -> combined hidden size

    key = jax.random.PRNGKey(0)
    k_params, k_enc, k_hid, k_ids = jax.random.split(key, 4)

    params = init_params(k_params, VOCAB, E, H, C)
    encoded_states = jax.random.normal(k_enc, (L, B, C), jnp.float32)
    last_hid_state = jax.random.normal(k_hid, (B, H), jnp.float32)
    word_ids = jax.random.randint(k_ids, (T, B), 0, VOCAB, jnp.int32)

    packed = pack_params(params)     # one-time weight fusion / transpose / bf16 cast
    h_seq, comb_seq, att_seq, probs_seq, h_fin = decode_forward(
        word_ids, encoded_states, last_hid_state, params, packed)
    jax.block_until_ready((h_seq, comb_seq, att_seq, probs_seq, h_fin))

    # pure-JAX reference: T sequential applications of the module forward
    h = last_hid_state
    hs, cs, ats, prs = [], [], [], []
    for t in range(T):
        s, ti, att, pr = decoder_reference(word_ids[t], encoded_states, h, params)
        hs.append(s); cs.append(ti); ats.append(att); prs.append(pr)
        h = s
    h_ref = jnp.stack(hs)
    comb_ref = jnp.stack(cs)
    att_ref = jnp.stack(ats)
    probs_ref = jnp.stack(prs)

    # bf16 MXU weights + approx reciprocal -> relaxed tolerances
    tol = dict(rtol=5e-2, atol=5e-2)
    np.testing.assert_allclose(np.asarray(h_seq), np.asarray(h_ref), **tol)
    np.testing.assert_allclose(np.asarray(comb_seq), np.asarray(comb_ref), **tol)
    np.testing.assert_allclose(np.asarray(att_seq), np.asarray(att_ref), **tol)
    np.testing.assert_allclose(np.asarray(probs_seq), np.asarray(probs_ref), **tol)
    np.testing.assert_allclose(np.asarray(h_fin), np.asarray(h_ref[-1]), **tol)

    assert h_seq.shape == (T, B, H)
    assert comb_seq.shape == (T, B, H)
    assert att_seq.shape == (T, B, C)
    assert probs_seq.shape == (T, L, B, 1)
    assert h_fin.shape == (B, H)
    print("KERNEL_OK")
</pallas_src>

<mosaic_0001>
module attributes {stable_mosaic.version = 11 : i64} {
  func.func @decode_kernel(%arg0: i32, %arg1: memref<1x8x16xf32, #tpu.memory_space<vmem>>, %arg2: memref<64x64xf32, #tpu.memory_space<vmem>>, %arg3: memref<8x32xf32, #tpu.memory_space<vmem>>, %arg4: memref<64x32xbf16, #tpu.memory_space<vmem>>, %arg5: memref<32x32xbf16, #tpu.memory_space<vmem>>, %arg6: memref<1x32xf32, #tpu.memory_space<vmem>>, %arg7: memref<1x32xf32, #tpu.memory_space<vmem>>, %arg8: memref<112x96xbf16, #tpu.memory_space<vmem>>, %arg9: memref<1x96xf32, #tpu.memory_space<vmem>>, %arg10: memref<32x32xbf16, #tpu.memory_space<vmem>>, %arg11: memref<112x32xbf16, #tpu.memory_space<vmem>>, %arg12: memref<1x32xf32, #tpu.memory_space<vmem>>, %arg13: memref<1x8x128xf32, #tpu.memory_space<vmem>>, %arg14: memref<1x8x128xf32, #tpu.memory_space<vmem>>, %arg15: memref<8x32xf32, #tpu.memory_space<vmem>>, %arg16: memref<8x32xf32, #tpu.memory_space<vmem>>, %arg17: memref<64x32xf32, #tpu.memory_space<vmem>>) attributes {dimension_semantics = [#tpu.dimension_semantics<arbitrary>], iteration_bounds = array<i64: 4>, scalar_prefetch = 0 : i64, scratch_operands = 2 : i64, tpu.core_type = #tpu.core_type<tc>, window_params = [{transform_indices = @transform_0, window_bounds = array<i64: 1, 8, 16>}, {pipeline_mode = #tpu.pipeline_mode<synchronous>, transform_indices = @transform_1, window_bounds = array<i64: 64, 64>}, {pipeline_mode = #tpu.pipeline_mode<synchronous>, transform_indices = @transform_2, window_bounds = array<i64: 8, 32>}, {pipeline_mode = #tpu.pipeline_mode<synchronous>, transform_indices = @transform_3, window_bounds = array<i64: 64, 32>}, {pipeline_mode = #tpu.pipeline_mode<synchronous>, transform_indices = @transform_4, window_bounds = array<i64: 32, 32>}, {pipeline_mode = #tpu.pipeline_mode<synchronous>, transform_indices = @transform_5, window_bounds = array<i64: 1, 32>}, {pipeline_mode = #tpu.pipeline_mode<synchronous>, transform_indices = @transform_6, window_bounds = array<i64: 1, 32>}, {pipeline_mode = #tpu.pipeline_mode<synchronous>, transform_indices = @transform_7, window_bounds = array<i64: 112, 96>}, {pipeline_mode = #tpu.pipeline_mode<synchronous>, transform_indices = @transform_8, window_bounds = array<i64: 1, 96>}, {pipeline_mode = #tpu.pipeline_mode<synchronous>, transform_indices = @transform_9, window_bounds = array<i64: 32, 32>}, {pipeline_mode = #tpu.pipeline_mode<synchronous>, transform_indices = @transform_10, window_bounds = array<i64: 112, 32>}, {pipeline_mode = #tpu.pipeline_mode<synchronous>, transform_indices = @transform_11, window_bounds = array<i64: 1, 32>}, {transform_indices = @transform_12, window_bounds = array<i64: 1, 8, 128>}, {transform_indices = @transform_13, window_bounds = array<i64: 1, 8, 128>}, {pipeline_mode = #tpu.pipeline_mode<synchronous>, transform_indices = @transform_14, window_bounds = array<i64: 8, 32>}]} {
    %c0 = arith.constant 0 : index
    %c0_0 = arith.constant 0 : index
    %0 = vector.load %arg2[%c0, %c0_0] : memref<64x64xf32, #tpu.memory_space<vmem>>, vector<64x64xf32>
    %c0_i32 = arith.constant 0 : i32
    %1 = arith.cmpi eq, %arg0, %c0_i32 : i32
    %2 = arith.extui %1 : i1 to i32
    %c0_i32_1 = arith.constant 0 : i32
    %3 = arith.cmpi ne, %2, %c0_i32_1 : i32
    scf.if %3 {
      %c0_43 = arith.constant 0 : index
      %c0_44 = arith.constant 0 : index
      %123 = vector.load %arg3[%c0_43, %c0_44] : memref<8x32xf32, #tpu.memory_space<vmem>>, vector<8x32xf32>
      %c0_45 = arith.constant 0 : index
      %c0_46 = arith.constant 0 : index
      %124 = vector.load %arg16[%c0_45, %c0_46] : memref<8x32xf32, #tpu.memory_space<vmem>>, vector<8x32xf32>
      tpu.vector_store %arg16[%c0_45, %c0_46], %123 {strides = array<i32>} : memref<8x32xf32, #tpu.memory_space<vmem>>, vector<8x32xf32>,
      %c0_47 = arith.constant 0 : index
      %c0_48 = arith.constant 0 : index
      %125 = vector.load %arg4[%c0_47, %c0_48] : memref<64x32xbf16, #tpu.memory_space<vmem>>, vector<64x32xbf16>
      %126 = arith.extf %125 : vector<64x32xbf16> to vector<64x32xf32>
      %cst_49 = arith.constant dense<0.000000e+00> : vector<64x32xf32>
      %127 = tpu.matmul %0, %126, %cst_49 {dimension_numbers = #tpu.dot_dimension_numbers<[1], [0], [0], [1], [0, 0, 1, 1], [], []>} : vector<64x64xf32>, vector<64x32xf32>, vector<64x32xf32> -> vector<64x32xf32>
      %c0_50 = arith.constant 0 : index
      %c0_51 = arith.constant 0 : index
      %128 = vector.load %arg6[%c0_50, %c0_51] : memref<1x32xf32, #tpu.memory_space<vmem>>, vector<1x32xf32>
      %129 = vector.broadcast %128 : vector<1x32xf32> to vector<64x32xf32>
      %130 = arith.addf %127, %129 : vector<64x32xf32>
      %c0_52 = arith.constant 0 : index
      %c0_53 = arith.constant 0 : index
      %131 = vector.load %arg17[%c0_52, %c0_53] : memref<64x32xf32, #tpu.memory_space<vmem>>, vector<64x32xf32>
      tpu.vector_store %arg17[%c0_52, %c0_53], %130 {strides = array<i32>} : memref<64x32xf32, #tpu.memory_space<vmem>>, vector<64x32xf32>,
    } else {
    }
    %c0_2 = arith.constant 0 : index
    %c0_3 = arith.constant 0 : index
    %4 = vector.load %arg16[%c0_2, %c0_3] : memref<8x32xf32, #tpu.memory_space<vmem>>, vector<8x32xf32>
    %c0_4 = arith.constant 0 : index
    %c0_5 = arith.constant 0 : index
    %c0_6 = arith.constant 0 : index
    %5 = vector.load %arg1[%c0_4, %c0_5, %c0_6] : memref<1x8x16xf32, #tpu.memory_space<vmem>>, vector<1x8x16xf32>
    %6 = vector.shape_cast %5 : vector<1x8x16xf32> to vector<8x16xf32>
    %c0_7 = arith.constant 0 : index
    %c0_8 = arith.constant 0 : index
    %7 = vector.load %arg5[%c0_7, %c0_8] : memref<32x32xbf16, #tpu.memory_space<vmem>>, vector<32x32xbf16>
    %8 = arith.extf %7 : vector<32x32xbf16> to vector<32x32xf32>
    %cst = arith.constant dense<0.000000e+00> : vector<8x32xf32>
    %9 = tpu.matmul %4, %8, %cst {dimension_numbers = #tpu.dot_dimension_numbers<[1], [0], [0], [1], [0, 0, 1, 1], [], []>} : vector<8x32xf32>, vector<32x32xf32>, vector<8x32xf32> -> vector<8x32xf32>
    %10 = tpu.concatenate %9, %9, %9, %9, %9, %9, %9, %9 in 0 : vector<8x32xf32>, vector<8x32xf32>, vector<8x32xf32>, vector<8x32xf32>, vector<8x32xf32>, vector<8x32xf32>, vector<8x32xf32>, vector<8x32xf32> -> vector<64x32xf32>
    %c0_9 = arith.constant 0 : index
    %c0_10 = arith.constant 0 : index
    %11 = vector.load %arg17[%c0_9, %c0_10] : memref<64x32xf32, #tpu.memory_space<vmem>>, vector<64x32xf32>
    %12 = arith.addf %11, %10 : vector<64x32xf32>
    %13 = math.tanh %12 : vector<64x32xf32>
    %c0_11 = arith.constant 0 : index
    %c0_12 = arith.constant 0 : index
    %14 = vector.load %arg7[%c0_11, %c0_12] : memref<1x32xf32, #tpu.memory_space<vmem>>, vector<1x32xf32>
    %15 = vector.broadcast %14 : vector<1x32xf32> to vector<64x32xf32>
    %16 = arith.mulf %13, %15 : vector<64x32xf32>
    %cst_13 = arith.constant dense<0.000000e+00> : vector<64xf32>
    %17 = vector.multi_reduction <add>, %16, %cst_13 [1] : vector<64x32xf32> to vector<64xf32>
    %18 = vector.shape_cast %17 : vector<64xf32> to vector<64x1xf32>
    %19 = vector.extract_strided_slice %18 {offsets = [0, 0], sizes = [8, 1], strides = [1, 1]} : vector<64x1xf32> to vector<8x1xf32>
    %20 = vector.extract_strided_slice %18 {offsets = [8, 0], sizes = [8, 1], strides = [1, 1]} : vector<64x1xf32> to vector<8x1xf32>
    %21 = vector.extract_strided_slice %18 {offsets = [16, 0], sizes = [8, 1], strides = [1, 1]} : vector<64x1xf32> to vector<8x1xf32>
    %22 = vector.extract_strided_slice %18 {offsets = [24, 0], sizes = [8, 1], strides = [1, 1]} : vector<64x1xf32> to vector<8x1xf32>
    %23 = vector.extract_strided_slice %18 {offsets = [32, 0], sizes = [8, 1], strides = [1, 1]} : vector<64x1xf32> to vector<8x1xf32>
    %24 = vector.extract_strided_slice %18 {offsets = [40, 0], sizes = [8, 1], strides = [1, 1]} : vector<64x1xf32> to vector<8x1xf32>
    %25 = vector.extract_strided_slice %18 {offsets = [48, 0], sizes = [8, 1], strides = [1, 1]} : vector<64x1xf32> to vector<8x1xf32>
    %26 = vector.extract_strided_slice %18 {offsets = [56, 0], sizes = [8, 1], strides = [1, 1]} : vector<64x1xf32> to vector<8x1xf32>
    %cst_14 = arith.constant -1.000000e+30 : f32
    %27 = vector.broadcast %cst_14 : f32 to vector<8x120xf32>
    %28 = tpu.concatenate %19, %20, %21, %22, %23, %24, %25, %26, %27 in 1 : vector<8x1xf32>, vector<8x1xf32>, vector<8x1xf32>, vector<8x1xf32>, vector<8x1xf32>, vector<8x1xf32>, vector<8x1xf32>, vector<8x1xf32>, vector<8x120xf32> -> vector<8x128xf32>
    %cst_15 = arith.constant dense<0xFF800000> : vector<8xf32>
    %29 = vector.multi_reduction <maximumf>, %28, %cst_15 [1] : vector<8x128xf32> to vector<8xf32>
    %30 = vector.shape_cast %29 : vector<8xf32> to vector<8x1xf32>
    %31 = vector.broadcast %30 : vector<8x1xf32> to vector<8x128xf32>
    %32 = arith.subf %28, %31 : vector<8x128xf32>
    %33 = math.exp %32 : vector<8x128xf32>
    %cst_16 = arith.constant dense<0.000000e+00> : vector<8xf32>
    %34 = vector.multi_reduction <add>, %33, %cst_16 [1] : vector<8x128xf32> to vector<8xf32>
    %35 = vector.shape_cast %34 : vector<8xf32> to vector<8x1xf32>
    %36 = tpu.reciprocal %35 {approx = true} : vector<8x1xf32> -> vector<8x1xf32>
    %37 = vector.broadcast %36 : vector<8x1xf32> to vector<8x128xf32>
    %38 = arith.mulf %33, %37 : vector<8x128xf32>
    %39 = vector.extract_strided_slice %38 {offsets = [0, 0], sizes = [8, 1], strides = [1, 1]} : vector<8x128xf32> to vector<8x1xf32>
    %40 = vector.extract_strided_slice %0 {offsets = [0, 0], sizes = [8, 64], strides = [1, 1]} : vector<64x64xf32> to vector<8x64xf32>
    %41 = vector.broadcast %39 : vector<8x1xf32> to vector<8x64xf32>
    %42 = arith.mulf %41, %40 : vector<8x64xf32>
    %43 = vector.extract_strided_slice %38 {offsets = [0, 1], sizes = [8, 1], strides = [1, 1]} : vector<8x128xf32> to vector<8x1xf32>
    %44 = vector.extract_strided_slice %0 {offsets = [8, 0], sizes = [8, 64], strides = [1, 1]} : vector<64x64xf32> to vector<8x64xf32>
    %45 = vector.broadcast %43 : vector<8x1xf32> to vector<8x64xf32>
    %46 = arith.mulf %45, %44 : vector<8x64xf32>
    %47 = arith.addf %42, %46 : vector<8x64xf32>
    %48 = vector.extract_strided_slice %38 {offsets = [0, 2], sizes = [8, 1], strides = [1, 1]} : vector<8x128xf32> to vector<8x1xf32>
    %49 = vector.extract_strided_slice %0 {offsets = [16, 0], sizes = [8, 64], strides = [1, 1]} : vector<64x64xf32> to vector<8x64xf32>
    %50 = vector.broadcast %48 : vector<8x1xf32> to vector<8x64xf32>
    %51 = arith.mulf %50, %49 : vector<8x64xf32>
    %52 = arith.addf %47, %51 : vector<8x64xf32>
    %53 = vector.extract_strided_slice %38 {offsets = [0, 3], sizes = [8, 1], strides = [1, 1]} : vector<8x128xf32> to vector<8x1xf32>
    %54 = vector.extract_strided_slice %0 {offsets = [24, 0], sizes = [8, 64], strides = [1, 1]} : vector<64x64xf32> to vector<8x64xf32>
    %55 = vector.broadcast %53 : vector<8x1xf32> to vector<8x64xf32>
    %56 = arith.mulf %55, %54 : vector<8x64xf32>
    %57 = arith.addf %52, %56 : vector<8x64xf32>
    %58 = vector.extract_strided_slice %38 {offsets = [0, 4], sizes = [8, 1], strides = [1, 1]} : vector<8x128xf32> to vector<8x1xf32>
    %59 = vector.extract_strided_slice %0 {offsets = [32, 0], sizes = [8, 64], strides = [1, 1]} : vector<64x64xf32> to vector<8x64xf32>
    %60 = vector.broadcast %58 : vector<8x1xf32> to vector<8x64xf32>
    %61 = arith.mulf %60, %59 : vector<8x64xf32>
    %62 = arith.addf %57, %61 : vector<8x64xf32>
    %63 = vector.extract_strided_slice %38 {offsets = [0, 5], sizes = [8, 1], strides = [1, 1]} : vector<8x128xf32> to vector<8x1xf32>
    %64 = vector.extract_strided_slice %0 {offsets = [40, 0], sizes = [8, 64], strides = [1, 1]} : vector<64x64xf32> to vector<8x64xf32>
    %65 = vector.broadcast %63 : vector<8x1xf32> to vector<8x64xf32>
    %66 = arith.mulf %65, %64 : vector<8x64xf32>
    %67 = arith.addf %62, %66 : vector<8x64xf32>
    %68 = vector.extract_strided_slice %38 {offsets = [0, 6], sizes = [8, 1], strides = [1, 1]} : vector<8x128xf32> to vector<8x1xf32>
    %69 = vector.extract_strided_slice %0 {offsets = [48, 0], sizes = [8, 64], strides = [1, 1]} : vector<64x64xf32> to vector<8x64xf32>
    %70 = vector.broadcast %68 : vector<8x1xf32> to vector<8x64xf32>
    %71 = arith.mulf %70, %69 : vector<8x64xf32>
    %72 = arith.addf %67, %71 : vector<8x64xf32>
    %73 = vector.extract_strided_slice %38 {offsets = [0, 7], sizes = [8, 1], strides = [1, 1]} : vector<8x128xf32> to vector<8x1xf32>
    %74 = vector.extract_strided_slice %0 {offsets = [56, 0], sizes = [8, 64], strides = [1, 1]} : vector<64x64xf32> to vector<8x64xf32>
    %75 = vector.broadcast %73 : vector<8x1xf32> to vector<8x64xf32>
    %76 = arith.mulf %75, %74 : vector<8x64xf32>
    %77 = arith.addf %72, %76 : vector<8x64xf32>
    %78 = tpu.concatenate %6, %4, %77 in 1 : vector<8x16xf32>, vector<8x32xf32>, vector<8x64xf32> -> vector<8x112xf32>
    %c0_17 = arith.constant 0 : index
    %c0_18 = arith.constant 0 : index
    %79 = vector.load %arg8[%c0_17, %c0_18] : memref<112x96xbf16, #tpu.memory_space<vmem>>, vector<112x96xbf16>
    %80 = arith.extf %79 : vector<112x96xbf16> to vector<112x96xf32>
    %cst_19 = arith.constant dense<0.000000e+00> : vector<8x96xf32>
    %81 = tpu.matmul %78, %80, %cst_19 {dimension_numbers = #tpu.dot_dimension_numbers<[1], [0], [0], [1], [0, 0, 1, 1], [], []>} : vector<8x112xf32>, vector<112x96xf32>, vector<8x96xf32> -> vector<8x96xf32>
    %c0_20 = arith.constant 0 : index
    %c0_21 = arith.constant 0 : index
    %82 = vector.load %arg9[%c0_20, %c0_21] : memref<1x96xf32, #tpu.memory_space<vmem>>, vector<1x96xf32>
    %83 = vector.broadcast %82 : vector<1x96xf32> to vector<8x96xf32>
    %84 = arith.addf %81, %83 : vector<8x96xf32>
    %85 = vector.extract_strided_slice %84 {offsets = [0, 0], sizes = [8, 64], strides = [1, 1]} : vector<8x96xf32> to vector<8x64xf32>
    %86 = arith.negf %85 : vector<8x64xf32>
    %87 = math.exp %86 : vector<8x64xf32>
    %cst_22 = arith.constant 1.000000e+00 : f32
    %88 = vector.broadcast %cst_22 : f32 to vector<8x64xf32>
    %89 = arith.addf %88, %87 : vector<8x64xf32>
    %90 = arith.divf %88, %89 : vector<8x64xf32>
    %91 = vector.extract_strided_slice %90 {offsets = [0, 0], sizes = [8, 32], strides = [1, 1]} : vector<8x64xf32> to vector<8x32xf32>
    %92 = vector.extract_strided_slice %90 {offsets = [0, 32], sizes = [8, 32], strides = [1, 1]} : vector<8x64xf32> to vector<8x32xf32>
    %93 = vector.extract_strided_slice %84 {offsets = [0, 64], sizes = [8, 32], strides = [1, 1]} : vector<8x96xf32> to vector<8x32xf32>
    %94 = arith.mulf %92, %4 : vector<8x32xf32>
    %c0_23 = arith.constant 0 : index
    %c0_24 = arith.constant 0 : index
    %95 = vector.load %arg10[%c0_23, %c0_24] : memref<32x32xbf16, #tpu.memory_space<vmem>>, vector<32x32xbf16>
    %96 = arith.extf %95 : vector<32x32xbf16> to vector<32x32xf32>
    %cst_25 = arith.constant dense<0.000000e+00> : vector<8x32xf32>
    %97 = tpu.matmul %94, %96, %cst_25 {dimension_numbers = #tpu.dot_dimension_numbers<[1], [0], [0], [1], [0, 0, 1, 1], [], []>} : vector<8x32xf32>, vector<32x32xf32>, vector<8x32xf32> -> vector<8x32xf32>
    %98 = arith.addf %93, %97 : vector<8x32xf32>
    %cst_26 = arith.constant 1.000000e+00 : f32
    %99 = vector.broadcast %cst_26 : f32 to vector<8x32xf32>
    %100 = arith.subf %99, %91 : vector<8x32xf32>
    %101 = arith.mulf %100, %4 : vector<8x32xf32>
    %102 = math.tanh %98 : vector<8x32xf32>
    %103 = arith.mulf %91, %102 : vector<8x32xf32>
    %104 = arith.addf %101, %103 : vector<8x32xf32>
    %105 = tpu.concatenate %104, %6, %77 in 1 : vector<8x32xf32>, vector<8x16xf32>, vector<8x64xf32> -> vector<8x112xf32>
    %c0_27 = arith.constant 0 : index
    %c0_28 = arith.constant 0 : index
    %106 = vector.load %arg11[%c0_27, %c0_28] : memref<112x32xbf16, #tpu.memory_space<vmem>>, vector<112x32xbf16>
    %107 = arith.extf %106 : vector<112x32xbf16> to vector<112x32xf32>
    %cst_29 = arith.constant dense<0.000000e+00> : vector<8x32xf32>
    %108 = tpu.matmul %105, %107, %cst_29 {dimension_numbers = #tpu.dot_dimension_numbers<[1], [0], [0], [1], [0, 0, 1, 1], [], []>} : vector<8x112xf32>, vector<112x32xf32>, vector<8x32xf32> -> vector<8x32xf32>
    %c0_30 = arith.constant 0 : index
    %c0_31 = arith.constant 0 : index
    %109 = vector.load %arg12[%c0_30, %c0_31] : memref<1x32xf32, #tpu.memory_space<vmem>>, vector<1x32xf32>
    %110 = vector.broadcast %109 : vector<1x32xf32> to vector<8x32xf32>
    %111 = arith.addf %108, %110 : vector<8x32xf32>
    %cst_32 = arith.constant 0.000000e+00 : f32
    %112 = vector.broadcast %cst_32 : f32 to vector<8x32xf32>
    %113 = arith.maximumf %111, %112 : vector<8x32xf32>
    %c0_33 = arith.constant 0 : index
    %c0_34 = arith.constant 0 : index
    %114 = vector.load %arg16[%c0_33, %c0_34] : memref<8x32xf32, #tpu.memory_space<vmem>>, vector<8x32xf32>
    tpu.vector_store %arg16[%c0_33, %c0_34], %104 {strides = array<i32>} : memref<8x32xf32, #tpu.memory_space<vmem>>, vector<8x32xf32>,
    %c0_35 = arith.constant 0 : index
    %c0_36 = arith.constant 0 : index
    %115 = vector.load %arg15[%c0_35, %c0_36] : memref<8x32xf32, #tpu.memory_space<vmem>>, vector<8x32xf32>
    tpu.vector_store %arg15[%c0_35, %c0_36], %104 {strides = array<i32>} : memref<8x32xf32, #tpu.memory_space<vmem>>, vector<8x32xf32>,
    %116 = tpu.concatenate %104, %113, %77 in 1 : vector<8x32xf32>, vector<8x32xf32>, vector<8x64xf32> -> vector<8x128xf32>
    %c0_37 = arith.constant 0 : index
    %c0_38 = arith.constant 0 : index
    %c0_39 = arith.constant 0 : index
    %117 = vector.load %arg13[%c0_37, %c0_38, %c0_39] : memref<1x8x128xf32, #tpu.memory_space<vmem>>, vector<1x8x128xf32>
    %118 = vector.shape_cast %117 : vector<1x8x128xf32> to vector<8x128xf32>
    %119 = vector.shape_cast %116 : vector<8x128xf32> to vector<1x8x128xf32>
    tpu.vector_store %arg13[%c0_37, %c0_38, %c0_39], %119 {strides = array<i32>} : memref<1x8x128xf32, #tpu.memory_space<vmem>>, vector<1x8x128xf32>,
    %c0_40 = arith.constant 0 : index
    %c0_41 = arith.constant 0 : index
    %c0_42 = arith.constant 0 : index
    %120 = vector.load %arg14[%c0_40, %c0_41, %c0_42] : memref<1x8x128xf32, #tpu.memory_space<vmem>>, vector<1x8x128xf32>
    %121 = vector.shape_cast %120 : vector<1x8x128xf32> to vector<8x128xf32>
    %122 = vector.shape_cast %38 : vector<8x128xf32> to vector<1x8x128xf32>
    tpu.vector_store %arg14[%c0_40, %c0_41, %c0_42], %122 {strides = array<i32>} : memref<1x8x128xf32, #tpu.memory_space<vmem>>, vector<1x8x128xf32>,
    return
  }
  func.func @transform_0(%arg0: i32) -> (i32, i32, i32) {
    %c0_i32 = arith.constant 0 : i32
    %c0_i32_0 = arith.constant 0 : i32
    %c0_i32_1 = arith.constant 0 : i32
    return %arg0, %c0_i32, %c0_i32_0 : i32, i32, i32
  }
  func.func @transform_1(%arg0: i32) -> (i32, i32) {
    %c0_i32 = arith.constant 0 : i32
    %c0_i32_0 = arith.constant 0 : i32
    %c0_i32_1 = arith.constant 0 : i32
    return %c0_i32, %c0_i32_0 : i32, i32
  }
  func.func @transform_2(%arg0: i32) -> (i32, i32) {
    %c0_i32 = arith.constant 0 : i32
    %c0_i32_0 = arith.constant 0 : i32
    %c0_i32_1 = arith.constant 0 : i32
    return %c0_i32, %c0_i32_0 : i32, i32
  }
  func.func @transform_3(%arg0: i32) -> (i32, i32) {
    %c0_i32 = arith.constant 0 : i32
    %c0_i32_0 = arith.constant 0 : i32
    %c0_i32_1 = arith.constant 0 : i32
    return %c0_i32, %c0_i32_0 : i32, i32
  }
  func.func @transform_4(%arg0: i32) -> (i32, i32) {
    %c0_i32 = arith.constant 0 : i32
    %c0_i32_0 = arith.constant 0 : i32
    %c0_i32_1 = arith.constant 0 : i32
    return %c0_i32, %c0_i32_0 : i32, i32
  }
  func.func @transform_5(%arg0: i32) -> (i32, i32) {
    %c0_i32 = arith.constant 0 : i32
    %c0_i32_0 = arith.constant 0 : i32
    %c0_i32_1 = arith.constant 0 : i32
    return %c0_i32, %c0_i32_0 : i32, i32
  }
  func.func @transform_6(%arg0: i32) -> (i32, i32) {
    %c0_i32 = arith.constant 0 : i32
    %c0_i32_0 = arith.constant 0 : i32
    %c0_i32_1 = arith.constant 0 : i32
    return %c0_i32, %c0_i32_0 : i32, i32
  }
  func.func @transform_7(%arg0: i32) -> (i32, i32) {
    %c0_i32 = arith.constant 0 : i32
    %c0_i32_0 = arith.constant 0 : i32
    %c0_i32_1 = arith.constant 0 : i32
    return %c0_i32, %c0_i32_0 : i32, i32
  }
  func.func @transform_8(%arg0: i32) -> (i32, i32) {
    %c0_i32 = arith.constant 0 : i32
    %c0_i32_0 = arith.constant 0 : i32
    %c0_i32_1 = arith.constant 0 : i32
    return %c0_i32, %c0_i32_0 : i32, i32
  }
  func.func @transform_9(%arg0: i32) -> (i32, i32) {
    %c0_i32 = arith.constant 0 : i32
    %c0_i32_0 = arith.constant 0 : i32
    %c0_i32_1 = arith.constant 0 : i32
    return %c0_i32, %c0_i32_0 : i32, i32
  }
  func.func @transform_10(%arg0: i32) -> (i32, i32) {
    %c0_i32 = arith.constant 0 : i32
    %c0_i32_0 = arith.constant 0 : i32
    %c0_i32_1 = arith.constant 0 : i32
    return %c0_i32, %c0_i32_0 : i32, i32
  }
  func.func @transform_11(%arg0: i32) -> (i32, i32) {
    %c0_i32 = arith.constant 0 : i32
    %c0_i32_0 = arith.constant 0 : i32
    %c0_i32_1 = arith.constant 0 : i32
    return %c0_i32, %c0_i32_0 : i32, i32
  }
  func.func @transform_12(%arg0: i32) -> (i32, i32, i32) {
    %c0_i32 = arith.constant 0 : i32
    %c0_i32_0 = arith.constant 0 : i32
    %c0_i32_1 = arith.constant 0 : i32
    return %arg0, %c0_i32, %c0_i32_0 : i32, i32, i32
  }
  func.func @transform_13(%arg0: i32) -> (i32, i32, i32) {
    %c0_i32 = arith.constant 0 : i32
    %c0_i32_0 = arith.constant 0 : i32
    %c0_i32_1 = arith.constant 0 : i32
    return %arg0, %c0_i32, %c0_i32_0 : i32, i32, i32
  }
  func.func @transform_14(%arg0: i32) -> (i32, i32) {
    %c0_i32 = arith.constant 0 : i32
    %c0_i32_0 = arith.constant 0 : i32
    %c0_i32_1 = arith.constant 0 : i32
    return %c0_i32, %c0_i32_0 : i32, i32
  }
}

</mosaic_0001>

<llo_original>
// kernel: tpu_custom_call.1
$region0: #{tpu_custom_call.1}
  #allocation0 [shape = 'u32[]', space=smem, size = 0x4, offset = 0x4, fixed_abs, tag = 'smem constant byte address 0x4 - core index']
  #allocation1 [shape = 'u32[72,128]{1,0:T(1,128)}', space=vmem, size = 0x9000, scoped, tag = 'internal scratch']
  #allocation2 [shape = 'f32[8,32]{1,0:T(8,128)}', space=vmem, size = 0x1000, scoped, tag = 'scratch operand']
  #allocation3 [shape = 'f32[64,32]{1,0:T(8,128)}', space=vmem, size = 0x8000, scoped, tag = 'scratch operand']
  %s0 = inlined_call_operand.vmem [shape: f32[4,8,16], index: 0, kind: input, shape index: {}]
  %s1 = inlined_call_operand.vmem [shape: f32[64,64], index: 1, kind: input, shape index: {}]
  %s2 = inlined_call_operand.vmem [shape: f32[8,32], index: 2, kind: input, shape index: {}]
  %s3 = inlined_call_operand.vmem [shape: bf16[64,32], index: 3, kind: input, shape index: {}]
  %s4 = inlined_call_operand.vmem [shape: bf16[32,32], index: 4, kind: input, shape index: {}]
  %s5 = inlined_call_operand.vmem [shape: f32[1,32], index: 5, kind: input, shape index: {}]
  %s6 = inlined_call_operand.vmem [shape: f32[1,32], index: 6, kind: input, shape index: {}]
  %s7 = inlined_call_operand.vmem [shape: bf16[112,96], index: 7, kind: input, shape index: {}]
  %s8 = inlined_call_operand.vmem [shape: f32[1,96], index: 8, kind: input, shape index: {}]
  %s9 = inlined_call_operand.vmem [shape: bf16[32,32], index: 9, kind: input, shape index: {}]
  %s10 = inlined_call_operand.vmem [shape: bf16[112,32], index: 10, kind: input, shape index: {}]
  %s11 = inlined_call_operand.vmem [shape: f32[1,32], index: 11, kind: input, shape index: {}]
  %s12 = inlined_call_operand.hbm [shape: f32[4,8,128], index: 12, kind: output, shape index: {0}]
  %s13 = inlined_call_operand.hbm [shape: f32[4,8,128], index: 13, kind: output, shape index: {1}]
  %s14 = inlined_call_operand.hbm [shape: f32[8,32], index: 14, kind: output, shape index: {2}]
  %15 = xla_tuple %s12, %s13, %s14
  %s16 = sld [smem:[#allocation0]]
  $region101: #{tpu_custom_call.1} parent=0
    _
  %s18 = ssub.s32 1, %s16
  %s19 = scalar_select 0, %s18, %s16
  $region1: #{tpu_custom_call.1} parent=0
    #allocation4 [shape = 'u8[8192]{0}', space=vmem, size = 0x2000, scoped, tag = 'output window, operand 0']
    #allocation5 [shape = 's32[2]{0}', space=sflag, size = 0x8, scoped, tag = 'scoped memory for tpu_custom_call.1']
    #allocation6 [shape = 'u8[8192]{0}', space=vmem, size = 0x2000, scoped, tag = 'output window, operand 1']
    #allocation7 [shape = 's32[2]{0}', space=sflag, size = 0x8, scoped, tag = 'scoped memory for tpu_custom_call.1']
    #allocation8 [shape = 'u8[4096]{0}', space=vmem, size = 0x1000, scoped, tag = 'output window, operand 2, single buffered']
    %20 = vsyncpa [#allocation5], 0
    %s21 = scalar_lea.sflag [#allocation5], 1
    %22 = vsyncpa %s21, 0
    %23 = vsyncpa [#allocation7], 0
    %s24 = scalar_lea.sflag [#allocation7], 1
    %25 = vsyncpa %s24, 0
    loop: start=0, step=1, limit=6
    $region2: #{tpu_custom_call.1} parent=1 // loop_pre_header
      _
    $region3: #{tpu_custom_call.1} parent=1 // loop_header
      %s27 = sphi 0, %s31
      %p28 = scmp.ge.s32.totalorder %s27, 6
      %s37 = sphi 0, %s39
      %s40 = sphi 0, %s37
      %s41 = sphi 0, %s40
      %s57 = sphi 0, %s41
      %s61 = sphi 0, %s61
      %s63 = sphi 0, %s61
      %s64 = sphi 0, %s63
      %s78 = sphi 0, %s64
      %s82 = sphi 0, %s82
      %s84 = sphi 0, %s82
      %s85 = sphi 0, %s84
      %s99 = sphi 0, %s85
      %s103 = sphi 0, %s103
      %s105 = sphi 0, %s103
      %s106 = sphi 0, %s105
      %s120 = sphi 0, %s106
      %s124 = sphi 0, %s124
      %s126 = sphi 0, %s124
      %s127 = sphi 0, %s126
      %s141 = sphi 0, %s127
      %s145 = sphi 0, %s145
      %s147 = sphi 0, %s145
      %s148 = sphi 0, %s147
      %s162 = sphi 0, %s148
      %s166 = sphi 0, %s166
      %s168 = sphi 0, %s166
      %s169 = sphi 0, %s168
      %s183 = sphi 0, %s169
      %s187 = sphi 0, %s187
      %s189 = sphi 0, %s187
      %s190 = sphi 0, %s189
      %s204 = sphi 0, %s190
      %s208 = sphi 0, %s208
      %s210 = sphi 0, %s208
      %s211 = sphi 0, %s210
      %s225 = sphi 0, %s211
      %s229 = sphi 0, %s229
      %s231 = sphi 0, %s229
      %s232 = sphi 0, %s231
      %s246 = sphi 0, %s232
      %s250 = sphi 0, %s250
      %s252 = sphi 0, %s250
      %s253 = sphi 0, %s252
      %s267 = sphi 0, %s253
      %s271 = sphi 0, %s271
      %s273 = sphi 0, %s271
      %s274 = sphi 0, %s273
      %s288 = sphi 0, %s274
      %s294 = sphi 0, %s296
      %s297 = sphi 0, %s294
      %s298 = sphi 0, %s297
      %s314 = sphi 0, %s298
      %s320 = sphi 0, %s322
      %s323 = sphi 0, %s320
      %s324 = sphi 0, %s323
      %s340 = sphi 0, %s324
      %s344 = sphi 0, %s344
      %s346 = sphi 0, %s344
      %s347 = sphi 0, %s346
      %s361 = sphi 0, %s347
    $region4: #{tpu_custom_call.1} parent=1 // loop_header_branch
      %30 = sbr.rel (%p28) target = $region8
    $region5: #{tpu_custom_call.1} parent=1 // loop_body
      %s32 = ssub.s32 %s27, 1
      %s33 = ssub.s32 %s27, 2
      %s34 = sadd.s32 %s27, 1
      %s35 = ssub.s32 %s27, %s34
      %p36 = scmp.eq.s32.totalorder %s35, 0
      %s38 = sadd.s32 %s37, 1
      %s39 = scalar_select %p36, %s37, %s38
      %p42 = pneg %p36
      %p43 = scmp.eq.s32.totalorder %s27, 3
      %p44 = por %p42, %p43
      %p45 = scmp.ne.s32.totalorder %s37, %s40
      %p46 = scmp.eq.s32.totalorder %s27, 0
      %p47 = por %p45, %p46
      %p48 = scmp.ne.s32.totalorder %s37, %s40
      %p49 = scmp.eq.s32.totalorder %s32, 3
      %p50 = por %p48, %p49
      %p51 = scmp.ne.s32.totalorder %s40, %s41
      %p52 = scmp.eq.s32.totalorder %s32, 0
      %p53 = por %p51, %p52
      %p54 = scmp.ne.s32.totalorder %s40, %s41
      %p55 = scmp.eq.s32.totalorder %s33, 3
      %p56 = por %p54, %p55
      %p58 = scmp.ne.s32.totalorder %s41, %s57
      %p59 = scmp.eq.s32.totalorder %s33, 0
      %p60 = por %p58, %p59
      %s62 = sadd.s32 %s61, 1
      %p65 = scmp.eq.s32.totalorder %s27, 3
      %p66 = scmp.ne.s32.totalorder %s61, %s63
      %p67 = scmp.eq.s32.totalorder %s27, 0
      %p68 = por %p66, %p67
      %p69 = scmp.ne.s32.totalorder %s61, %s63
      %p70 = scmp.eq.s32.totalorder %s32, 3
      %p71 = por %p69, %p70
      %p72 = scmp.ne.s32.totalorder %s63, %s64
      %p73 = scmp.eq.s32.totalorder %s32, 0
      %p74 = por %p72, %p73
      %p75 = scmp.ne.s32.totalorder %s63, %s64
      %p76 = scmp.eq.s32.totalorder %s33, 3
      %p77 = por %p75, %p76
      %p79 = scmp.ne.s32.totalorder %s64, %s78
      %p80 = scmp.eq.s32.totalorder %s33, 0
      %p81 = por %p79, %p80
      %s83 = sadd.s32 %s82, 1
      %p86 = scmp.eq.s32.totalorder %s27, 3
      %p87 = scmp.ne.s32.totalorder %s82, %s84
      %p88 = scmp.eq.s32.totalorder %s27, 0
      %p89 = por %p87, %p88
      %p90 = scmp.ne.s32.totalorder %s82, %s84
      %p91 = scmp.eq.s32.totalorder %s32, 3
      %p92 = por %p90, %p91
      %p93 = scmp.ne.s32.totalorder %s84, %s85
      %p94 = scmp.eq.s32.totalorder %s32, 0
      %p95 = por %p93, %p94
      %p96 = scmp.ne.s32.totalorder %s84, %s85
      %p97 = scmp.eq.s32.totalorder %s33, 3
      %p98 = por %p96, %p97
      %p100 = scmp.ne.s32.totalorder %s85, %s99
      %p101 = scmp.eq.s32.totalorder %s33, 0
      %p102 = por %p100, %p101
      %s104 = sadd.s32 %s103, 1
      %p107 = scmp.eq.s32.totalorder %s27, 3
      %p108 = scmp.ne.s32.totalorder %s103, %s105
      %p109 = scmp.eq.s32.totalorder %s27, 0
      %p110 = por %p108, %p109
      %p111 = scmp.ne.s32.totalorder %s103, %s105
      %p112 = scmp.eq.s32.totalorder %s32, 3
      %p113 = por %p111, %p112
      %p114 = scmp.ne.s32.totalorder %s105, %s106
      %p115 = scmp.eq.s32.totalorder %s32, 0
      %p116 = por %p114, %p115
      %p117 = scmp.ne.s32.totalorder %s105, %s106
      %p118 = scmp.eq.s32.totalorder %s33, 3
      %p119 = por %p117, %p118
      %p121 = scmp.ne.s32.totalorder %s106, %s120
      %p122 = scmp.eq.s32.totalorder %s33, 0
      %p123 = por %p121, %p122
      %s125 = sadd.s32 %s124, 1
      %p128 = scmp.eq.s32.totalorder %s27, 3
      %p129 = scmp.ne.s32.totalorder %s124, %s126
      %p130 = scmp.eq.s32.totalorder %s27, 0
      %p131 = por %p129, %p130
      %p132 = scmp.ne.s32.totalorder %s124, %s126
      %p133 = scmp.eq.s32.totalorder %s32, 3
      %p134 = por %p132, %p133
      %p135 = scmp.ne.s32.totalorder %s126, %s127
      %p136 = scmp.eq.s32.totalorder %s32, 0
      %p137 = por %p135, %p136
      %p138 = scmp.ne.s32.totalorder %s126, %s127
      %p139 = scmp.eq.s32.totalorder %s33, 3
      %p140 = por %p138, %p139
      %p142 = scmp.ne.s32.totalorder %s127, %s141
      %p143 = scmp.eq.s32.totalorder %s33, 0
      %p144 = por %p142, %p143
      %s146 = sadd.s32 %s145, 1
      %p149 = scmp.eq.s32.totalorder %s27, 3
      %p150 = scmp.ne.s32.totalorder %s145, %s147
      %p151 = scmp.eq.s32.totalorder %s27, 0
      %p152 = por %p150, %p151
      %p153 = scmp.ne.s32.totalorder %s145, %s147
      %p154 = scmp.eq.s32.totalorder %s32, 3
      %p155 = por %p153, %p154
      %p156 = scmp.ne.s32.totalorder %s147, %s148
      %p157 = scmp.eq.s32.totalorder %s32, 0
      %p158 = por %p156, %p157
      %p159 = scmp.ne.s32.totalorder %s147, %s148
      %p160 = scmp.eq.s32.totalorder %s33, 3
      %p161 = por %p159, %p160
      %p163 = scmp.ne.s32.totalorder %s148, %s162
      %p164 = scmp.eq.s32.totalorder %s33, 0
      %p165 = por %p163, %p164
      %s167 = sadd.s32 %s166, 1
      %p170 = scmp.eq.s32.totalorder %s27, 3
      %p171 = scmp.ne.s32.totalorder %s166, %s168
      %p172 = scmp.eq.s32.totalorder %s27, 0
      %p173 = por %p171, %p172
      %p174 = scmp.ne.s32.totalorder %s166, %s168
      %p175 = scmp.eq.s32.totalorder %s32, 3
      %p176 = por %p174, %p175
      %p177 = scmp.ne.s32.totalorder %s168, %s169
      %p178 = scmp.eq.s32.totalorder %s32, 0
      %p179 = por %p177, %p178
      %p180 = scmp.ne.s32.totalorder %s168, %s169
      %p181 = scmp.eq.s32.totalorder %s33, 3
      %p182 = por %p180, %p181
      %p184 = scmp.ne.s32.totalorder %s169, %s183
      %p185 = scmp.eq.s32.totalorder %s33, 0
      %p186 = por %p184, %p185
      %s188 = sadd.s32 %s187, 1
      %p191 = scmp.eq.s32.totalorder %s27, 3
      %p192 = scmp.ne.s32.totalorder %s187, %s189
      %p193 = scmp.eq.s32.totalorder %s27, 0
      %p194 = por %p192, %p193
      %p195 = scmp.ne.s32.totalorder %s187, %s189
      %p196 = scmp.eq.s32.totalorder %s32, 3
      %p197 = por %p195, %p196
      %p198 = scmp.ne.s32.totalorder %s189, %s190
      %p199 = scmp.eq.s32.totalorder %s32, 0
      %p200 = por %p198, %p199
      %p201 = scmp.ne.s32.totalorder %s189, %s190
      %p202 = scmp.eq.s32.totalorder %s33, 3
      %p203 = por %p201, %p202
      %p205 = scmp.ne.s32.totalorder %s190, %s204
      %p206 = scmp.eq.s32.totalorder %s33, 0
      %p207 = por %p205, %p206
      %s209 = sadd.s32 %s208, 1
      %p212 = scmp.eq.s32.totalorder %s27, 3
      %p213 = scmp.ne.s32.totalorder %s208, %s210
      %p214 = scmp.eq.s32.totalorder %s27, 0
      %p215 = por %p213, %p214
      %p216 = scmp.ne.s32.totalorder %s208, %s210
      %p217 = scmp.eq.s32.totalorder %s32, 3
      %p218 = por %p216, %p217
      %p219 = scmp.ne.s32.totalorder %s210, %s211
      %p220 = scmp.eq.s32.totalorder %s32, 0
      %p221 = por %p219, %p220
      %p222 = scmp.ne.s32.totalorder %s210, %s211
      %p223 = scmp.eq.s32.totalorder %s33, 3
      %p224 = por %p222, %p223
      %p226 = scmp.ne.s32.totalorder %s211, %s225
      %p227 = scmp.eq.s32.totalorder %s33, 0
      %p228 = por %p226, %p227
      %s230 = sadd.s32 %s229, 1
      %p233 = scmp.eq.s32.totalorder %s27, 3
      %p234 = scmp.ne.s32.totalorder %s229, %s231
      %p235 = scmp.eq.s32.totalorder %s27, 0
      %p236 = por %p234, %p235
      %p237 = scmp.ne.s32.totalorder %s229, %s231
      %p238 = scmp.eq.s32.totalorder %s32, 3
      %p239 = por %p237, %p238
      %p240 = scmp.ne.s32.totalorder %s231, %s232
      %p241 = scmp.eq.s32.totalorder %s32, 0
      %p242 = por %p240, %p241
      %p243 = scmp.ne.s32.totalorder %s231, %s232
      %p244 = scmp.eq.s32.totalorder %s33, 3
      %p245 = por %p243, %p244
      %p247 = scmp.ne.s32.totalorder %s232, %s246
      %p248 = scmp.eq.s32.totalorder %s33, 0
      %p249 = por %p247, %p248
      %s251 = sadd.s32 %s250, 1
      %p254 = scmp.eq.s32.totalorder %s27, 3
      %p255 = scmp.ne.s32.totalorder %s250, %s252
      %p256 = scmp.eq.s32.totalorder %s27, 0
      %p257 = por %p255, %p256
      %p258 = scmp.ne.s32.totalorder %s250, %s252
      %p259 = scmp.eq.s32.totalorder %s32, 3
      %p260 = por %p258, %p259
      %p261 = scmp.ne.s32.totalorder %s252, %s253
      %p262 = scmp.eq.s32.totalorder %s32, 0
      %p263 = por %p261, %p262
      %p264 = scmp.ne.s32.totalorder %s252, %s253
      %p265 = scmp.eq.s32.totalorder %s33, 3
      %p266 = por %p264, %p265
      %p268 = scmp.ne.s32.totalorder %s253, %s267
      %p269 = scmp.eq.s32.totalorder %s33, 0
      %p270 = por %p268, %p269
      %s272 = sadd.s32 %s271, 1
      %p275 = scmp.eq.s32.totalorder %s27, 3
      %p276 = scmp.ne.s32.totalorder %s271, %s273
      %p277 = scmp.eq.s32.totalorder %s27, 0
      %p278 = por %p276, %p277
      %p279 = scmp.ne.s32.totalorder %s271, %s273
      %p280 = scmp.eq.s32.totalorder %s32, 3
      %p281 = por %p279, %p280
      %p282 = scmp.ne.s32.totalorder %s273, %s274
      %p283 = scmp.eq.s32.totalorder %s32, 0
      %p284 = por %p282, %p283
      %p285 = scmp.ne.s32.totalorder %s273, %s274
      %p286 = scmp.eq.s32.totalorder %s33, 3
      %p287 = por %p285, %p286
      %p289 = scmp.ne.s32.totalorder %s274, %s288
      %p290 = scmp.eq.s32.totalorder %s33, 0
      %p291 = por %p289, %p290
      %s292 = ssub.s32 %s27, %s34
      %p293 = scmp.eq.s32.totalorder %s292, 0
      %s295 = sadd.s32 %s294, 1
      %s296 = scalar_select %p293, %s294, %s295
      %p299 = pneg %p293
      %p300 = scmp.eq.s32.totalorder %s27, 3
      %p301 = por %p299, %p300
      %p302 = scmp.ne.s32.totalorder %s294, %s297
      %p303 = scmp.eq.s32.totalorder %s27, 0
      %p304 = por %p302, %p303
      %p305 = scmp.ne.s32.totalorder %s294, %s297
      %p306 = scmp.eq.s32.totalorder %s32, 3
      %p307 = por %p305, %p306
      %p308 = scmp.ne.s32.totalorder %s297, %s298
      %p309 = scmp.eq.s32.totalorder %s32, 0
      %p310 = por %p308, %p309
      %p311 = scmp.ne.s32.totalorder %s297, %s298
      %p312 = scmp.eq.s32.totalorder %s33, 3
      %p313 = por %p311, %p312
      %p315 = scmp.ne.s32.totalorder %s298, %s314
      %p316 = scmp.eq.s32.totalorder %s33, 0
      %p317 = por %p315, %p316
      %s318 = ssub.s32 %s27, %s34
      %p319 = scmp.eq.s32.totalorder %s318, 0
      %s321 = sadd.s32 %s320, 1
      %s322 = scalar_select %p319, %s320, %s321
      %p325 = pneg %p319
      %p326 = scmp.eq.s32.totalorder %s27, 3
      %p327 = por %p325, %p326
      %p328 = scmp.ne.s32.totalorder %s320, %s323
      %p329 = scmp.eq.s32.totalorder %s27, 0
      %p330 = por %p328, %p329
      %p331 = scmp.ne.s32.totalorder %s320, %s323
      %p332 = scmp.eq.s32.totalorder %s32, 3
      %p333 = por %p331, %p332
      %p334 = scmp.ne.s32.totalorder %s323, %s324
      %p335 = scmp.eq.s32.totalorder %s32, 0
      %p336 = por %p334, %p335
      %p337 = scmp.ne.s32.totalorder %s323, %s324
      %p338 = scmp.eq.s32.totalorder %s33, 3
      %p339 = por %p337, %p338
      %p341 = scmp.ne.s32.totalorder %s324, %s340
      %p342 = scmp.eq.s32.totalorder %s33, 0
      %p343 = por %p341, %p342
      %s345 = sadd.s32 %s344, 1
      %p348 = scmp.eq.s32.totalorder %s27, 3
      %p349 = scmp.ne.s32.totalorder %s344, %s346
      %p350 = scmp.eq.s32.totalorder %s27, 0
      %p351 = por %p349, %p350
      %p352 = scmp.ne.s32.totalorder %s344, %s346
      %p353 = scmp.eq.s32.totalorder %s32, 3
      %p354 = por %p352, %p353
      %p355 = scmp.ne.s32.totalorder %s346, %s347
      %p356 = scmp.eq.s32.totalorder %s32, 0
      %p357 = por %p355, %p356
      %p358 = scmp.ne.s32.totalorder %s346, %s347
      %p359 = scmp.eq.s32.totalorder %s33, 3
      %p360 = por %p358, %p359
      %p362 = scmp.ne.s32.totalorder %s347, %s361
      %p363 = scmp.eq.s32.totalorder %s33, 0
      %p364 = por %p362, %p363
      %p365 = scmp.le.s32.totalorder 1, %s27
      %p366 = scmp.lt.s32.totalorder %s27, 5
      %p367 = pnand %p365, %p366
      %p368 = pneg %p367
      // Predicated region
      $region9: #{tpu_custom_call.1} parent=5 // pred_check
        _
      $region10: #{tpu_custom_call.1} parent=5 // pred_check_branch
        %370 = sbr.rel (%p367) target = $region12
      $region11: #{tpu_custom_call.1} parent=5 // pred_region
        %s371 = ssub.s32 %s27, 1
        // Predicated region
        $region13: #{tpu_custom_call.1} parent=11 // pred_check
          %p372 = pneg %p74
        $region14: #{tpu_custom_call.1} parent=11 // pred_check_branch
          %374 = sbr.rel (%p372) target = $region16
        $region15: #{tpu_custom_call.1} parent=11 // pred_region
          _
        $region16: #{tpu_custom_call.1} parent=11 // pred_fallthru
          _
        // Predicated region
        $region17: #{tpu_custom_call.1} parent=11 // pred_check
          %p375 = pneg %p95
        $region18: #{tpu_custom_call.1} parent=11 // pred_check_branch
          %377 = sbr.rel (%p375) target = $region20
        $region19: #{tpu_custom_call.1} parent=11 // pred_region
          _
        $region20: #{tpu_custom_call.1} parent=11 // pred_fallthru
          _
        // Predicated region
        $region21: #{tpu_custom_call.1} parent=11 // pred_check
          %p378 = pneg %p116
        $region22: #{tpu_custom_call.1} parent=11 // pred_check_branch
          %380 = sbr.rel (%p378) target = $region24
        $region23: #{tpu_custom_call.1} parent=11 // pred_region
          _
        $region24: #{tpu_custom_call.1} parent=11 // pred_fallthru
          _
        // Predicated region
        $region25: #{tpu_custom_call.1} parent=11 // pred_check
          %p381 = pneg %p137
        $region26: #{tpu_custom_call.1} parent=11 // pred_check_branch
          %383 = sbr.rel (%p381) target = $region28
        $region27: #{tpu_custom_call.1} parent=11 // pred_region
          _
        $region28: #{tpu_custom_call.1} parent=11 // pred_fallthru
          _
        // Predicated region
        $region29: #{tpu_custom_call.1} parent=11 // pred_check
          %p384 = pneg %p158
        $region30: #{tpu_custom_call.1} parent=11 // pred_check_branch
          %386 = sbr.rel (%p384) target = $region32
        $region31: #{tpu_custom_call.1} parent=11 // pred_region
          _
        $region32: #{tpu_custom_call.1} parent=11 // pred_fallthru
          _
        // Predicated region
        $region33: #{tpu_custom_call.1} parent=11 // pred_check
          %p387 = pneg %p179
        $region34: #{tpu_custom_call.1} parent=11 // pred_check_branch
          %389 = sbr.rel (%p387) target = $region36
        $region35: #{tpu_custom_call.1} parent=11 // pred_region
          _
        $region36: #{tpu_custom_call.1} parent=11 // pred_fallthru
          _
        // Predicated region
        $region37: #{tpu_custom_call.1} parent=11 // pred_check
          %p390 = pneg %p200
        $region38: #{tpu_custom_call.1} parent=11 // pred_check_branch
          %392 = sbr.rel (%p390) target = $region40
        $region39: #{tpu_custom_call.1} parent=11 // pred_region
          _
        $region40: #{tpu_custom_call.1} parent=11 // pred_fallthru
          _
        // Predicated region
        $region41: #{tpu_custom_call.1} parent=11 // pred_check
          %p393 = pneg %p221
        $region42: #{tpu_custom_call.1} parent=11 // pred_check_branch
          %395 = sbr.rel (%p393) target = $region44
        $region43: #{tpu_custom_call.1} parent=11 // pred_region
          _
        $region44: #{tpu_custom_call.1} parent=11 // pred_fallthru
          _
        // Predicated region
        $region45: #{tpu_custom_call.1} parent=11 // pred_check
          %p396 = pneg %p242
        $region46: #{tpu_custom_call.1} parent=11 // pred_check_branch
          %398 = sbr.rel (%p396) target = $region48
        $region47: #{tpu_custom_call.1} parent=11 // pred_region
          _
        $region48: #{tpu_custom_call.1} parent=11 // pred_fallthru
          _
        // Predicated region
        $region49: #{tpu_custom_call.1} parent=11 // pred_check
          %p399 = pneg %p263
        $region50: #{tpu_custom_call.1} parent=11 // pred_check_branch
          %401 = sbr.rel (%p399) target = $region52
        $region51: #{tpu_custom_call.1} parent=11 // pred_region
          _
        $region52: #{tpu_custom_call.1} parent=11 // pred_fallthru
          _
        // Predicated region
        $region53: #{tpu_custom_call.1} parent=11 // pred_check
          %p402 = pneg %p284
        $region54: #{tpu_custom_call.1} parent=11 // pred_check_branch
          %404 = sbr.rel (%p402) target = $region56
        $region55: #{tpu_custom_call.1} parent=11 // pred_region
          _
        $region56: #{tpu_custom_call.1} parent=11 // pred_fallthru
          _
      $region12: #{tpu_custom_call.1} parent=5 // pred_fallthru
        _
      %p405 = scmp.lt.s32.totalorder %s27, 4
      // Predicated region
      $region57: #{tpu_custom_call.1} parent=5 // pred_check
        %p406 = pneg %p405
      $region58: #{tpu_custom_call.1} parent=5 // pred_check_branch
        %408 = sbr.rel (%p406) target = $region60
      $region59: #{tpu_custom_call.1} parent=5 // pred_region
        // Predicated region
        $region61: #{tpu_custom_call.1} parent=59 // pred_check
          %p409 = pneg %p47
        $region62: #{tpu_custom_call.1} parent=59 // pred_check_branch
          %411 = sbr.rel (%p409) target = $region64
        $region63: #{tpu_custom_call.1} parent=59 // pred_region
          %p412 = scmp.lt.s32.totalorder %s27, 3
          %s413 = scalar_select %p412, %s27, 3
          %s414 = smul.addr %s413, 8
          %s415 = scalar_lea.vmem %s0, %s414
        $region64: #{tpu_custom_call.1} parent=59 // pred_fallthru
          _
      $region60: #{tpu_custom_call.1} parent=5 // pred_fallthru
        _
      %p416 = scmp.le.s32.totalorder 1, %s27
      %p417 = scmp.lt.s32.totalorder %s27, 5
      %p418 = pnand %p416, %p417
      %p419 = pneg %p418
      // Predicated region
      $region65: #{tpu_custom_call.1} parent=5 // pred_check
        _
      $region66: #{tpu_custom_call.1} parent=5 // pred_check_branch
        %421 = sbr.rel (%p418) target = $region68
      $region67: #{tpu_custom_call.1} parent=5 // pred_region
        %s422 = ssub.s32 %s27, 1
        %p423 = scmp.lt.s32.totalorder %s32, 3
        %s424 = scalar_select %p423, %s32, 3
        %s425 = smul.addr %s424, 8
        %s426 = scalar_lea.vmem %s0, %s425
        %p427 = pneg %p53
        %p428 = pneg %p50
        %p429 = pneg %p74
        %p430 = pneg %p71
        %p431 = pneg %p95
        %p432 = pneg %p92
        %p433 = pneg %p116
        %p434 = pneg %p113
        %p435 = pneg %p137
        %p436 = pneg %p134
        %p437 = pneg %p158
        %p438 = pneg %p155
        %p439 = pneg %p179
        %p440 = pneg %p176
        %p441 = pneg %p200
        %p442 = pneg %p197
        %p443 = pneg %p221
        %p444 = pneg %p218
        %p445 = pneg %p242
        %p446 = pneg %p239
        %p447 = pneg %p263
        %p448 = pneg %p260
        %p449 = pneg %p284
        %p450 = pneg %p281
        %p451 = pneg %p310
        %p452 = pneg %p307
        %s453 = sand.u32 %s297, 1
        %s454 = scalar_lea.sflag [#allocation5], %s453
        %s455 = sand.u32 %s297, 1
        %s456 = smul.addr %s455, 8
        %s457 = scalar_lea.vmem [#allocation4], %s456
        %p458 = pneg %p336
        %p459 = pneg %p333
        %s460 = sand.u32 %s32, 1
        %s461 = scalar_lea.sflag [#allocation7], %s460
        %s462 = sand.u32 %s323, 1
        %s463 = smul.addr %s462, 8
        %s464 = scalar_lea.vmem [#allocation6], %s463
        %p465 = pneg %p357
        %p466 = pneg %p354
        %p467 = scmp.lt.s32.totalorder %s32, 3
        %s468 = scalar_select %p467, %s32, 3
        %s469 = smul.addr %s468, 8
        %s470 = scalar_lea.vmem %s0, %s469
        %v471 = vld [vmem:[%s1] sm:$0xff]
        %v472 = vld [vmem:[%s1 + $0x8] sm:$0xff]
        %v473 = vld [vmem:[%s1 + $0x10] sm:$0xff]
        %v474 = vld [vmem:[%s1 + $0x18] sm:$0xff]
        %v475 = vld [vmem:[%s1 + $0x20] sm:$0xff]
        %v476 = vld [vmem:[%s1 + $0x28] sm:$0xff]
        %v477 = vld [vmem:[%s1 + $0x30] sm:$0xff]
        %v478 = vld [vmem:[%s1 + $0x38] sm:$0xff]
        %p479 = scmp.eq.s32.totalorder %s32, 0
        // Predicated region
        $region69: #{tpu_custom_call.1} parent=67 // pred_check
          %p480 = pneg %p479
        $region70: #{tpu_custom_call.1} parent=67 // pred_check_branch
          %482 = sbr.rel (%p480) target = $region72
        $region71: #{tpu_custom_call.1} parent=67 // pred_region
          %v483 = vld [vmem:[%s2] sm:$0xff]
          %vm484 = vcmask 261120
          %485 = vst.msk [vmem:[#allocation2] sm:$0xff] %vm484, %v483
          %v486 = vld [vmem:[%s3] sm:$0xf]
          %v487 = vld [vmem:[%s3 + $0x4] sm:$0xf]
          %v488 = vld [vmem:[%s3 + $0x8] sm:$0xf]
          %v489 = vld [vmem:[%s3 + $0xc] sm:$0xf]
          %v490 = vld [vmem:[%s3 + $0x10] sm:$0xf]
          %v491 = vld [vmem:[%s3 + $0x14] sm:$0xf]
          %v492 = vld [vmem:[%s3 + $0x18] sm:$0xf]
          %v493 = vld [vmem:[%s3 + $0x1c] sm:$0xf]
          %v494 = vunpack.c.l.bf16 %v486
          %v495 = vunpack.c.l.bf16 %v487
          %v496 = vunpack.c.l.bf16 %v488
          %v497 = vunpack.c.l.bf16 %v489
          %v498 = vunpack.c.l.bf16 %v490
          %v499 = vunpack.c.l.bf16 %v491
          %v500 = vunpack.c.l.bf16 %v492
          %v501 = vunpack.c.l.bf16 %v493
          %v502 = vld [vmem:[%s5] sm:$0x1]
          %v504 = vperm.slane %v502, 0
          %vm506 = vcmask 523264
          %v508 = vsel %vm506, %v471, 0
          %v511 = vsel %vm506, %v472, 0
          %v514 = vsel %vm506, %v473, 0
          %v517 = vsel %vm506, %v474, 0
          %v520 = vsel %vm506, %v475, 0
          %v523 = vsel %vm506, %v476, 0
          %v526 = vsel %vm506, %v477, 0
          %v529 = vsel %vm506, %v478, 0
          %531 = vmatpush.msra.mxu0 0.0
          %532 = vmatpush.msra.mxu0 0.0
          %533 = vmatpush.msra.mxu0 0.0
          %534 = vmatpush.msra.mxu0 0.0
          %535 = vmatpush.msra.mxu0 0.0
          %536 = vmatpush.msra.mxu0 0.0
          %537 = vmatpush.msra.mxu0 0.0
          %538 = vmatpush.msra.mxu0 0.0
          %539 = vmatpush.msra.mxu0 %v501
          %540 = vmatpush.msra.mxu0 %v500
          %541 = vmatpush.msra.mxu0 %v499
          %542 = vmatpush.msra.mxu0 %v498
          %543 = vmatpush.msra.mxu0 %v497
          %544 = vmatpush.msra.mxu0 %v496
          %545 = vmatpush.msra.mxu0 %v495
          %546 = vmatpush.msra.mxu0 %v494
          %547 = vmatmul.f32.gmra.mxu0 %v508
          %v548 = vpop.f32.mrf.mxu0
          %v549 = vadd.f32 %v504, %v548
          %550 = vmatmul.f32.gmra.mxu0 %v511
          %v551 = vpop.f32.mrf.mxu0
          %v552 = vadd.f32 %v504, %v551
          %553 = vmatmul.f32.gmra.mxu0 %v514
          %v554 = vpop.f32.mrf.mxu0
          %v555 = vadd.f32 %v504, %v554
          %556 = vmatmul.f32.gmra.mxu0 %v517
          %v557 = vpop.f32.mrf.mxu0
          %v558 = vadd.f32 %v504, %v557
          %559 = vmatmul.f32.gmra.mxu0 %v520
          %v560 = vpop.f32.mrf.mxu0
          %v561 = vadd.f32 %v504, %v560
          %562 = vmatmul.f32.gmra.mxu0 %v523
          %v563 = vpop.f32.mrf.mxu0
          %v564 = vadd.f32 %v504, %v563
          %565 = vmatmul.f32.gmra.mxu0 %v526
          %v566 = vpop.f32.mrf.mxu0
          %v567 = vadd.f32 %v504, %v566
          %568 = vmatmul.f32.gmra.mxu0 %v529
          %v569 = vpop.f32.mrf.mxu0
          %v570 = vadd.f32 %v504, %v569
          %571 = vdwg.mxu0
          %572 = vst.msk [vmem:[#allocation3] sm:$0xff] %vm484, %v549
          %573 = vst.msk [vmem:[#allocation3 + $0x8] sm:$0xff] %vm484, %v552
          %574 = vst.msk [vmem:[#allocation3 + $0x10] sm:$0xff] %vm484, %v555
          %575 = vst.msk [vmem:[#allocation3 + $0x18] sm:$0xff] %vm484, %v558
          %576 = vst.msk [vmem:[#allocation3 + $0x20] sm:$0xff] %vm484, %v561
          %577 = vst.msk [vmem:[#allocation3 + $0x28] sm:$0xff] %vm484, %v564
          %578 = vst.msk [vmem:[#allocation3 + $0x30] sm:$0xff] %vm484, %v567
          %579 = vst.msk [vmem:[#allocation3 + $0x38] sm:$0xff] %vm484, %v570
        $region72: #{tpu_custom_call.1} parent=67 // pred_fallthru
          _
        %v580 = vld [vmem:[#allocation2] sm:$0xff]
        %v581 = vld [vmem:[%s470] sm:$0xff]
        %v582 = vld [vmem:[%s4] sm:$0xf]
        %v583 = vld [vmem:[%s4 + $0x4] sm:$0xf]
        %v584 = vld [vmem:[%s4 + $0x8] sm:$0xf]
        %v585 = vld [vmem:[%s4 + $0xc] sm:$0xf]
        %v586 = vunpack.c.l.bf16 %v582
        %v587 = vunpack.c.l.bf16 %v583
        %v588 = vunpack.c.l.bf16 %v584
        %v589 = vunpack.c.l.bf16 %v585
        %vm590 = vcmask 261120
        %v592 = vsel %vm590, %v580, 0
        %594 = vmatpush.msra.mxu0 0.0
        %595 = vmatpush.msra.mxu0 0.0
        %596 = vmatpush.msra.mxu0 0.0
        %597 = vmatpush.msra.mxu0 0.0
        %598 = vmatpush.msra.mxu0 0.0
        %599 = vmatpush.msra.mxu0 0.0
        %600 = vmatpush.msra.mxu0 0.0
        %601 = vmatpush.msra.mxu0 0.0
        %602 = vmatpush.msra.mxu0 0.0
        %603 = vmatpush.msra.mxu0 0.0
        %604 = vmatpush.msra.mxu0 0.0
        %605 = vmatpush.msra.mxu0 0.0
        %606 = vmatpush.msra.mxu0 %v589
        %607 = vmatpush.msra.mxu0 %v588
        %608 = vmatpush.msra.mxu0 %v587
        %609 = vmatpush.msra.mxu0 %v586
        %610 = vmatmul.f32.gmra.mxu0 %v592
        %v611 = vpop.f32.mrf.mxu0
        %v612 = vadd.f32 0.0, %v611
        %613 = vdwg.mxu0
        %v614 = vld [vmem:[#allocation3] sm:$0xff]
        %v615 = vld [vmem:[#allocation3 + $0x8] sm:$0xff]
        %v616 = vld [vmem:[#allocation3 + $0x10] sm:$0xff]
        %v617 = vld [vmem:[#allocation3 + $0x18] sm:$0xff]
        %v618 = vld [vmem:[#allocation3 + $0x20] sm:$0xff]
        %v619 = vld [vmem:[#allocation3 + $0x28] sm:$0xff]
        %v620 = vld [vmem:[#allocation3 + $0x30] sm:$0xff]
        %v621 = vld [vmem:[#allocation3 + $0x38] sm:$0xff]
        %v622 = vadd.f32 %v614, %v612
        %v623 = vadd.f32 %v615, %v612
        %v624 = vadd.f32 %v616, %v612
        %v625 = vadd.f32 %v617, %v612
        %v626 = vadd.f32 %v618, %v612
        %v627 = vadd.f32 %v619, %v612
        %v628 = vadd.f32 %v620, %v612
        %v629 = vadd.f32 %v621, %v612
        %v630 = vtanh.pop %v622
        %v631 = vtanh.pop %v623
        %v632 = vtanh.pop %v624
        %v633 = vtanh.pop %v625
        %v634 = vtanh.pop %v626
        %v635 = vtanh.pop %v627
        %v636 = vtanh.pop %v628
        %v637 = vtanh.pop %v629
        %v638 = vld [vmem:[%s6] sm:$0x1]
        %v640 = vperm.slane %v638, 0
        %v642 = vmul.f32 %v630, %v640
        %v643 = vmul.f32 %v631, %v640
        %v644 = vmul.f32 %v632, %v640
        %v645 = vmul.f32 %v633, %v640
        %v646 = vmul.f32 %v634, %v640
        %v647 = vmul.f32 %v635, %v640
        %v648 = vmul.f32 %v636, %v640
        %v649 = vmul.f32 %v637, %v640
        %v650 = vsel %vm590, %v642, 0.0
        %651 = vadd.xlane.f32.xlu0 %v650
        %v652 = vpop.xlane.xlu0 %651
        %v653 = vsel %vm590, %v643, 0.0
        %654 = vadd.xlane.f32.xlu0 %v653
        %v655 = vpop.xlane.xlu0 %654
        %v656 = vsel %vm590, %v644, 0.0
        %657 = vadd.xlane.f32.xlu0 %v656
        %v658 = vpop.xlane.xlu0 %657
        %v659 = vsel %vm590, %v645, 0.0
        %660 = vadd.xlane.f32.xlu0 %v659
        %v661 = vpop.xlane.xlu0 %660
        %v662 = vsel %vm590, %v646, 0.0
        %663 = vadd.xlane.f32.xlu0 %v662
        %v664 = vpop.xlane.xlu0 %663
        %v665 = vsel %vm590, %v647, 0.0
        %666 = vadd.xlane.f32.xlu0 %v665
        %v667 = vpop.xlane.xlu0 %666
        %v668 = vsel %vm590, %v648, 0.0
        %669 = vadd.xlane.f32.xlu0 %v668
        %v670 = vpop.xlane.xlu0 %669
        %v671 = vsel %vm590, %v649, 0.0
        %672 = vadd.xlane.f32.xlu0 %v671
        %v673 = vpop.xlane.xlu0 %672
        %vm674 = vcmask 7168
        %v675 = vsel %vm674, %v652, %v655
        %vm676 = vcmask 15360
        %v677 = vsel %vm676, %v675, %v658
        %vm678 = vcmask 23552
        %v679 = vsel %vm678, %v677, %v661
        %vm680 = vcmask 31744
        %v681 = vsel %vm680, %v679, %v664
        %vm682 = vcmask 39936
        %v683 = vsel %vm682, %v681, %v667
        %vm684 = vcmask 48128
        %v685 = vsel %vm684, %v683, %v670
        %vm686 = vcmask 56320
        %v687 = vsel %vm686, %v685, %v673
        %vm688 = vcmask 64512
        %v689 = vsel %vm688, %v687, -1e+30
        %690 = vmax.xlane.f32.xlu0 %v689
        %v691 = vpop.xlane.xlu0 %690
        %v692 = vsub.f32 %v689, %v691
        %v693 = vmul.f32 %v692, 1.442695
        %v694 = vpow.pop %v693
        %695 = vadd.xlane.f32.xlu0 %v694
        %v696 = vpop.xlane.xlu0 %695
        %v697 = vrcp.pop %v696
        %v698 = vmul.f32 %v694, %v697
        %700 = vset.pattern.permute.xlu0 0
        %701 = vperm.xlu0 %700, %v698
        %v702 = vpop.permute.xlu0 %701
        %v704 = vmul.f32 %v702, %v471
        %705 = vset.pattern.permute.xlu0 1
        %706 = vperm.xlu0 %705, %v698
        %v707 = vpop.permute.xlu0 %706
        %v709 = vmul.f32 %v707, %v472
        %v710 = vadd.f32 %v704, %v709
        %711 = vset.pattern.permute.xlu0 2
        %712 = vperm.xlu0 %711, %v698
        %v713 = vpop.permute.xlu0 %712
        %v715 = vmul.f32 %v713, %v473
        %v716 = vadd.f32 %v710, %v715
        %717 = vset.pattern.permute.xlu0 3
        %718 = vperm.xlu0 %717, %v698
        %v719 = vpop.permute.xlu0 %718
        %v721 = vmul.f32 %v719, %v474
        %v722 = vadd.f32 %v716, %v721
        %723 = vset.pattern.permute.xlu0 4
        %724 = vperm.xlu0 %723, %v698
        %v725 = vpop.permute.xlu0 %724
        %v727 = vmul.f32 %v725, %v475
        %v728 = vadd.f32 %v722, %v727
        %729 = vset.pattern.permute.xlu0 5
        %730 = vperm.xlu0 %729, %v698
        %v731 = vpop.permute.xlu0 %730
        %v733 = vmul.f32 %v731, %v476
        %v734 = vadd.f32 %v728, %v733
        %735 = vset.pattern.permute.xlu0 6
        %736 = vperm.xlu0 %735, %v698
        %v737 = vpop.permute.xlu0 %736
        %v739 = vmul.f32 %v737, %v477
        %v740 = vadd.f32 %v734, %v739
        %741 = vset.pattern.permute.xlu0 7
        %742 = vperm.xlu0 %741, %v698
        %v743 = vpop.permute.xlu0 %742
        %v745 = vmul.f32 %v743, %v478
        %v746 = vadd.f32 %v740, %v745
        %747 = vrot.lane.b32.xlu0 %v580, 16
        %v748 = vpop.permute.xlu0 %747
        %751 = vrot.lane.b32.xlu0 %v746, 48
        %v752 = vpop.permute.xlu0 %751
        %vm754 = vcmask 130048
        %v755 = vsel %vm754, %v581, %v748
        %vm756 = vcmask 392192
        %v757 = vsel %vm756, %v755, %v752
        %v758 = vld [vmem:[%s7] sm:$0xf]
        %v759 = vld [vmem:[%s7 + $0x4] sm:$0xf]
        %v760 = vld [vmem:[%s7 + $0x8] sm:$0xf]
        %v761 = vld [vmem:[%s7 + $0xc] sm:$0xf]
        %v762 = vld [vmem:[%s7 + $0x10] sm:$0xf]
        %v763 = vld [vmem:[%s7 + $0x14] sm:$0xf]
        %v764 = vld [vmem:[%s7 + $0x18] sm:$0xf]
        %v765 = vld [vmem:[%s7 + $0x1c] sm:$0xf]
        %v766 = vld [vmem:[%s7 + $0x20] sm:$0xf]
        %v767 = vld [vmem:[%s7 + $0x24] sm:$0xf]
        %v768 = vld [vmem:[%s7 + $0x28] sm:$0xf]
        %v769 = vld [vmem:[%s7 + $0x2c] sm:$0xf]
        %v770 = vld [vmem:[%s7 + $0x30] sm:$0xf]
        %v771 = vld [vmem:[%s7 + $0x34] sm:$0xf]
        %v772 = vunpack.c.l.bf16 %v758
        %v773 = vunpack.c.l.bf16 %v759
        %v774 = vunpack.c.l.bf16 %v760
        %v775 = vunpack.c.l.bf16 %v761
        %v776 = vunpack.c.l.bf16 %v762
        %v777 = vunpack.c.l.bf16 %v763
        %v778 = vunpack.c.l.bf16 %v764
        %v779 = vunpack.c.l.bf16 %v765
        %v780 = vunpack.c.l.bf16 %v766
        %v781 = vunpack.c.l.bf16 %v767
        %v782 = vunpack.c.l.bf16 %v768
        %v783 = vunpack.c.l.bf16 %v769
        %v784 = vunpack.c.l.bf16 %v770
        %v785 = vunpack.c.l.bf16 %v771
        %v786 = vld [vmem:[%s8] sm:$0x1]
        %v788 = vperm.slane %v786, 0
        %vm790 = vcmask 916480
        %v792 = vsel %vm790, %v757, 0
        %794 = vmatpush.msra.mxu0 0.0
        %795 = vmatpush.msra.mxu0 0.0
        %796 = vmatpush.msra.mxu0 %v785
        %797 = vmatpush.msra.mxu0 %v784
        %798 = vmatpush.msra.mxu0 %v783
        %799 = vmatpush.msra.mxu0 %v782
        %800 = vmatpush.msra.mxu0 %v781
        %801 = vmatpush.msra.mxu0 %v780
        %802 = vmatpush.msra.mxu0 %v779
        %803 = vmatpush.msra.mxu0 %v778
        %804 = vmatpush.msra.mxu0 %v777
        %805 = vmatpush.msra.mxu0 %v776
        %806 = vmatpush.msra.mxu0 %v775
        %807 = vmatpush.msra.mxu0 %v774
        %808 = vmatpush.msra.mxu0 %v773
        %809 = vmatpush.msra.mxu0 %v772
        %810 = vmatmul.f32.gmra.mxu0 %v792
        %v811 = vpop.f32.mrf.mxu0
        %v812 = vadd.f32 %v788, %v811
        %813 = vdwg.mxu0
        %v814 = vxor.u32 %v812, 2147483648
        %v815 = vmul.f32 %v814, 1.442695
        %v816 = vpow.pop %v815
        %v817 = vadd.f32 %v816, 1.0
        %v818 = vrcp.pop %v817
        %v819 = vmul.f32 %v817, %v818
        %v820 = vsub.f32 1.0, %v819
        %v821 = vmul.f32 %v818, %v820
        %v822 = vadd.f32 %v818, %v821
        %vm823 = vweird.f32 %v817
        %vm824 = vweird.f32 %v818
        %vm825 = vmor %vm823, %vm824
        %v826 = vsel %vm825, %v818, %v822
        %v827 = vand.u32 2147483647, %v817
        %vm828 = vcmp.eq.f32.partialorder %v827, 8.507059e+37
        %v829 = vand.u32 %v817, 2147483648
        %v830 = vor.u32 1.1754944e-38, %v829
        %v831 = vsel %vm828, %v830, %v826
        %v832 = vmul.f32 1.0, %v831
        %833 = vrot.lane.b32.xlu0 %v580, 32
        %v834 = vpop.permute.xlu0 %833
        %v836 = vmul.f32 %v832, %v834
        %v837 = vld [vmem:[%s9] sm:$0xf]
        %v838 = vld [vmem:[%s9 + $0x4] sm:$0xf]
        %v839 = vld [vmem:[%s9 + $0x8] sm:$0xf]
        %v840 = vld [vmem:[%s9 + $0xc] sm:$0xf]
        %v841 = vunpack.c.l.bf16 %v837
        %v842 = vunpack.c.l.bf16 %v838
        %v843 = vunpack.c.l.bf16 %v839
        %v844 = vunpack.c.l.bf16 %v840
        %846 = vrot.lane.b32.xlu0 %v836, 96
        %v847 = vpop.permute.xlu0 %846
        %v848 = vsel %vm590, %v847, 0
        %850 = vmatpush.msra.mxu0 0.0
        %851 = vmatpush.msra.mxu0 0.0
        %852 = vmatpush.msra.mxu0 0.0
        %853 = vmatpush.msra.mxu0 0.0
        %854 = vmatpush.msra.mxu0 0.0
        %855 = vmatpush.msra.mxu0 0.0
        %856 = vmatpush.msra.mxu0 0.0
        %857 = vmatpush.msra.mxu0 0.0
        %858 = vmatpush.msra.mxu0 0.0
        %859 = vmatpush.msra.mxu0 0.0
        %860 = vmatpush.msra.mxu0 0.0
        %861 = vmatpush.msra.mxu0 0.0
        %862 = vmatpush.msra.mxu0 %v844
        %863 = vmatpush.msra.mxu0 %v843
        %864 = vmatpush.msra.mxu0 %v842
        %865 = vmatpush.msra.mxu0 %v841
        %866 = vmatmul.f32.gmra.mxu0 %v848
        %v867 = vpop.f32.mrf.mxu0
        %v868 = vadd.f32 0.0, %v867
        %869 = vdwg.mxu0
        %871 = vrot.lane.b32.xlu0 %v868, 64
        %v872 = vpop.permute.xlu0 %871
        %v874 = vadd.f32 %v812, %v872
        %v875 = vsub.f32 1.0, %v832
        %v876 = vmul.f32 %v875, %v580
        %v877 = vtanh.pop %v874
        %879 = vrot.lane.b32.xlu0 %v877, 64
        %v880 = vpop.permute.xlu0 %879
        %v882 = vmul.f32 %v832, %v880
        %v883 = vadd.f32 %v876, %v882
        %885 = vrot.lane.b32.xlu0 %v581, 32
        %v886 = vpop.permute.xlu0 %885
        %v888 = vsel %vm590, %v883, %v886
        %v889 = vsel %vm756, %v888, %v752
        %v890 = vld [vmem:[%s10] sm:$0xf]
        %v891 = vld [vmem:[%s10 + $0x4] sm:$0xf]
        %v892 = vld [vmem:[%s10 + $0x8] sm:$0xf]
        %v893 = vld [vmem:[%s10 + $0xc] sm:$0xf]
        %v894 = vld [vmem:[%s10 + $0x10] sm:$0xf]
        %v895 = vld [vmem:[%s10 + $0x14] sm:$0xf]
        %v896 = vld [vmem:[%s10 + $0x18] sm:$0xf]
        %v897 = vld [vmem:[%s10 + $0x1c] sm:$0xf]
        %v898 = vld [vmem:[%s10 + $0x20] sm:$0xf]
        %v899 = vld [vmem:[%s10 + $0x24] sm:$0xf]
        %v900 = vld [vmem:[%s10 + $0x28] sm:$0xf]
        %v901 = vld [vmem:[%s10 + $0x2c] sm:$0xf]
        %v902 = vld [vmem:[%s10 + $0x30] sm:$0xf]
        %v903 = vld [vmem:[%s10 + $0x34] sm:$0xf]
        %v904 = vunpack.c.l.bf16 %v890
        %v905 = vunpack.c.l.bf16 %v891
        %v906 = vunpack.c.l.bf16 %v892
        %v907 = vunpack.c.l.bf16 %v893
        %v908 = vunpack.c.l.bf16 %v894
        %v909 = vunpack.c.l.bf16 %v895
        %v910 = vunpack.c.l.bf16 %v896
        %v911 = vunpack.c.l.bf16 %v897
        %v912 = vunpack.c.l.bf16 %v898
        %v913 = vunpack.c.l.bf16 %v899
        %v914 = vunpack.c.l.bf16 %v900
        %v915 = vunpack.c.l.bf16 %v901
        %v916 = vunpack.c.l.bf16 %v902
        %v917 = vunpack.c.l.bf16 %v903
        %v918 = vld [vmem:[%s11] sm:$0x1]
        %v920 = vperm.slane %v918, 0
        %v923 = vsel %vm790, %v889, 0
        %925 = vmatpush.msra.mxu0 0.0
        %926 = vmatpush.msra.mxu0 0.0
        %927 = vmatpush.msra.mxu0 %v917
        %928 = vmatpush.msra.mxu0 %v916
        %929 = vmatpush.msra.mxu0 %v915
        %930 = vmatpush.msra.mxu0 %v914
        %931 = vmatpush.msra.mxu0 %v913
        %932 = vmatpush.msra.mxu0 %v912
        %933 = vmatpush.msra.mxu0 %v911
        %934 = vmatpush.msra.mxu0 %v910
        %935 = vmatpush.msra.mxu0 %v909
        %936 = vmatpush.msra.mxu0 %v908
        %937 = vmatpush.msra.mxu0 %v907
        %938 = vmatpush.msra.mxu0 %v906
        %939 = vmatpush.msra.mxu0 %v905
        %940 = vmatpush.msra.mxu0 %v904
        %941 = vmatmul.f32.gmra.mxu0 %v923
        %v942 = vpop.f32.mrf.mxu0
        %v943 = vadd.f32 %v920, %v942
        %944 = vdwg.mxu0
        %v945 = vmax.f32 %v943, 0.0
        %946 = vst.msk [vmem:[#allocation2] sm:$0xff] %vm590, %v883
        %947 = vst.msk [vmem:[#allocation8] sm:$0xff] %vm590, %v883
        %949 = vrot.lane.b32.xlu0 %v945, 32
        %v950 = vpop.permute.xlu0 %949
        %952 = vrot.lane.b32.xlu0 %v746, 64
        %v953 = vpop.permute.xlu0 %952
        %v955 = vsel %vm590, %v883, %v950
        %vm956 = vcmask 523264
        %v957 = vsel %vm956, %v955, %v953
        %958 = vst [vmem:[%s457] sm:$0xff] %v957
        %959 = vst [vmem:[%s464] sm:$0xff] %v698
        %s960 = sand.u32 %s297, 1
        %s961 = scalar_lea.sflag [#allocation5], %s960
        %s962 = sand.u32 %s297, 1
        %s963 = smul.addr %s962, 8
        %s964 = scalar_lea.vmem [#allocation4], %s963
        %s965 = sand.u32 %s32, 1
        %s966 = scalar_lea.sflag [#allocation7], %s965
        %s967 = sand.u32 %s323, 1
        %s968 = smul.addr %s967, 8
        %s969 = scalar_lea.vmem [#allocation6], %s968
        // Predicated region
        $region73: #{tpu_custom_call.1} parent=67 // pred_check
          %p970 = pneg %p307
        $region74: #{tpu_custom_call.1} parent=67 // pred_check_branch
          %972 = sbr.rel (%p970) target = $region76
        $region75: #{tpu_custom_call.1} parent=67 // pred_region
          %974 = vsyncadd %s961, 0
          %s975 = smul.addr %s32, 8
          %s976 = scalar_lea.hbm %s12, %s975
          %s978 = sshll.u32 %s964, 4
          %s979 = int_to_ptr.vmem [resolvable:$true] %s978
          %s980 = sshll.u32 %s976, 4
          %s981 = int_to_ptr.hbm [resolvable:$true] %s980
          %983 = dma.vmem_to_hbm [thread:$0]  %s979, 128, %s981, %s961
        $region76: #{tpu_custom_call.1} parent=67 // pred_fallthru
          _
        // Predicated region
        $region77: #{tpu_custom_call.1} parent=67 // pred_check
          %p984 = pneg %p333
        $region78: #{tpu_custom_call.1} parent=67 // pred_check_branch
          %986 = sbr.rel (%p984) target = $region80
        $region79: #{tpu_custom_call.1} parent=67 // pred_region
          %988 = vsyncadd %s966, 0
          %s989 = smul.addr %s32, 8
          %s990 = scalar_lea.hbm %s13, %s989
          %s992 = sshll.u32 %s969, 4
          %s993 = int_to_ptr.vmem [resolvable:$true] %s992
          %s994 = sshll.u32 %s990, 4
          %s995 = int_to_ptr.hbm [resolvable:$true] %s994
          %997 = dma.vmem_to_hbm [thread:$0]  %s993, 128, %s995, %s966
        $region80: #{tpu_custom_call.1} parent=67 // pred_fallthru
          _
        // Predicated region
        $region81: #{tpu_custom_call.1} parent=67 // pred_check
          %p998 = pneg %p354
        $region82: #{tpu_custom_call.1} parent=67 // pred_check_branch
          %1000 = sbr.rel (%p998) target = $region84
        $region83: #{tpu_custom_call.1} parent=67 // pred_region
          %1002 = vsyncadd [#allocation7], 0
          %s1004 = sshll.u32 [#allocation8], 4
          %s1005 = int_to_ptr.vmem [resolvable:$true] %s1004
          %s1006 = sshll.u32 %s14, 4
          %s1007 = int_to_ptr.hbm [resolvable:$true] %s1006
          %1009 = dma.vmem_to_hbm [thread:$0]  %s1005, 128, %s1007, [#allocation7]
        $region84: #{tpu_custom_call.1} parent=67 // pred_fallthru
          _
        // Predicated region
        $region85: #{tpu_custom_call.1} parent=67 // pred_check
          %p1010 = pneg %p354
        $region86: #{tpu_custom_call.1} parent=67 // pred_check_branch
          %1012 = sbr.rel (%p1010) target = $region88
        $region87: #{tpu_custom_call.1} parent=67 // pred_region
          %1014 = dma.done [#allocation7], 128
        $region88: #{tpu_custom_call.1} parent=67 // pred_fallthru
          _
      $region68: #{tpu_custom_call.1} parent=5 // pred_fallthru
        _
      %p1015 = scmp.le.s32.totalorder 2, %s27
      // Predicated region
      $region89: #{tpu_custom_call.1} parent=5 // pred_check
        %p1016 = pneg %p1015
      $region90: #{tpu_custom_call.1} parent=5 // pred_check_branch
        %1018 = sbr.rel (%p1016) target = $region92
      $region91: #{tpu_custom_call.1} parent=5 // pred_region
        %s1019 = ssub.s32 %s27, 2
        // Predicated region
        $region93: #{tpu_custom_call.1} parent=91 // pred_check
          %p1020 = pneg %p313
        $region94: #{tpu_custom_call.1} parent=91 // pred_check_branch
          %1022 = sbr.rel (%p1020) target = $region96
        $region95: #{tpu_custom_call.1} parent=91 // pred_region
          %s1023 = sand.u32 %s298, 1
          %s1024 = scalar_lea.sflag [#allocation5], %s1023
          %s1025 = sand.u32 %s298, 1
          %s1026 = smul.addr %s1025, 8
          %s1027 = scalar_lea.vmem [#allocation4], %s1026
          %1029 = dma.done %s1024, 128
        $region96: #{tpu_custom_call.1} parent=91 // pred_fallthru
          _
        // Predicated region
        $region97: #{tpu_custom_call.1} parent=91 // pred_check
          %p1030 = pneg %p339
        $region98: #{tpu_custom_call.1} parent=91 // pred_check_branch
          %1032 = sbr.rel (%p1030) target = $region100
        $region99: #{tpu_custom_call.1} parent=91 // pred_region
          %s1033 = sand.u32 %s33, 1
          %s1034 = scalar_lea.sflag [#allocation7], %s1033
          %s1035 = sand.u32 %s324, 1
          %s1036 = smul.addr %s1035, 8
          %s1037 = scalar_lea.vmem [#allocation6], %s1036
          %1039 = dma.done %s1034, 128
        $region100: #{tpu_custom_call.1} parent=91 // pred_fallthru
          _
      $region92: #{tpu_custom_call.1} parent=5 // pred_fallthru
        _
    $region6: #{tpu_custom_call.1} parent=1 // loop_footer
      %s31 = sadd.s32 1, %s27
    $region7: #{tpu_custom_call.1} parent=1 // loop_footer_branch
      %26 = sbr.rel target = $region3
    $region8: #{tpu_custom_call.1} parent=1 // loop_exit
      _
    %1040 = vsyncpa [#allocation5], 1
    %s1041 = scalar_lea.sflag [#allocation5], 1
    %1042 = vsyncpa %s1041, 1
    %1043 = vsyncpa [#allocation7], 1
    %s1044 = scalar_lea.sflag [#allocation7], 1
    %1045 = vsyncpa %s1044, 1

</llo_original>
